<compile_context>
chip_gen: v5e
topology: v5e:2x2
jax: 0.10.0
libtpu: 0.0.40
codegen_flags: <defaults>
</compile_context>

<pallas_src>
import math

import jax
import jax.numpy as jnp
from jax.experimental import pallas as pl
from jax.experimental.pallas import tpu as pltpu


def make_mha_kernel(h, d_k):
    """Kernel over one (batch, query-tile) grid cell.

    Refs:
      q_ref : (q_blk, D)  query tokens for this tile
      k_ref : (L, D)      key tokens for this batch entry
      v_ref : (L, D)      value tokens for this batch entry
      wq/wk/wv/wo_ref : (D, D)   pre-transposed (in, out) weights; wq pre-scaled
      bq_ref : (1, D)     pre-scaled query bias
      bo_ref : (1, D)     output bias with bv folded in
      o_ref  : (q_blk, D) output tile
    """
    f32 = jnp.float32

    def kernel(q_ref, k_ref, v_ref, wq_ref, wk_ref, wv_ref, wo_ref,
               bq_ref, bo_ref, o_ref):
        q_blk, D = q_ref.shape
        L = k_ref.shape[0]

        # ---- Projections: three lean (tokens, D) @ (D, D) MXU passes. ----
        # scale and bq already folded into wq_ref/bq_ref; bk cancels in softmax;
        # bv is folded into bo_ref — so K/V need no bias add here.
        q = jnp.dot(q_ref[...], wq_ref[...], preferred_element_type=f32) + bq_ref[...]
        k = jnp.dot(k_ref[...], wk_ref[...], preferred_element_type=f32)
        v = jnp.dot(v_ref[...], wv_ref[...], preferred_element_type=f32)

        # Heads as a batched einsum axis (no per-head Python loop / lane slices).
        qh = q.reshape(q_blk, h, d_k)
        kh = k.reshape(L, h, d_k)
        vh = v.reshape(L, h, d_k)

        # ---- Head-batched scores (f32), numerically-stable exp. ----
        s = jnp.einsum("qhd,khd->hqk", qh, kh,
                       preferred_element_type=f32)            # (h, q_blk, L)
        m = jnp.max(s, axis=-1, keepdims=True)
        p = jnp.exp(s - m)                                    # unnormalized probs
        denom = jnp.sum(p, axis=-1)                           # (h, q_blk)

        # ---- PV matmul on unnormalized p; normalize the small context. ----
        ctx = jnp.einsum("hqk,khd->qhd", p, vh,
                         preferred_element_type=f32)          # (q_blk, h, d_k)
        inv = pl.reciprocal(denom, approx=False)              # exact divide
        ctx = ctx * inv.T[:, :, None]                         # (q_blk, h, 1) bcast

        # ---- Merged-head output projection: one (q_blk, D) @ (D, D) pass. ----
        out = jnp.dot(ctx.reshape(q_blk, h * d_k), wo_ref[...],
                      preferred_element_type=f32) + bo_ref[...]
        o_ref[...] = out.astype(o_ref.dtype)

    return kernel


def multi_head_attention(query, key, value, params, h, q_block=None):
    """query/key/value: (B, L, D) float32. params: dict of nn.Linear weights/biases."""
    B, L, D = query.shape
    assert D % h == 0
    d_k = D // h
    scale = 1.0 / math.sqrt(d_k)
    f32 = jnp.float32

    if q_block is None:
        q_block = L if L <= 128 else 128
    assert L % q_block == 0
    nq = L // q_block

    # --- Exact wrapper-side folds (eval mode). ---
    wq_t = (params["wq"].astype(f32) * scale).T          # (D, D), scale folded
    bq_s = (params["bq"].astype(f32) * scale).reshape(1, D)
    wk_t = params["wk"].astype(f32).T                    # bk dropped: cancels in softmax
    wv_t = params["wv"].astype(f32).T                    # bv folded into bo below
    wo_t = params["wo"].astype(f32).T
    bo_f = (params["bo"].astype(f32)
            + params["wo"].astype(f32) @ params["bv"].astype(f32)).reshape(1, D)

    grid = (B, nq)
    q_spec = pl.BlockSpec((None, q_block, D), lambda b, qi: (b, qi, 0))
    kv_spec = pl.BlockSpec((None, L, D), lambda b, qi: (b, 0, 0))
    w_spec = pl.BlockSpec((D, D), lambda b, qi: (0, 0))
    b_spec = pl.BlockSpec((1, D), lambda b, qi: (0, 0))
    o_spec = pl.BlockSpec((None, q_block, D), lambda b, qi: (b, qi, 0))

    out = pl.pallas_call(
        make_mha_kernel(h, d_k),
        out_shape=jax.ShapeDtypeStruct((B, L, D), query.dtype),
        grid=grid,
        in_specs=[q_spec, kv_spec, kv_spec,
                  w_spec, w_spec, w_spec, w_spec,
                  b_spec, b_spec],
        out_specs=o_spec,
        compiler_params=pltpu.CompilerParams(
            dimension_semantics=("parallel", "parallel")),
    )(query, key, value, wq_t, wk_t, wv_t, wo_t, bq_s, bo_f)
    return out


def reference_mha(query, key, value, params, h):
    """Pure-JAX transcription of the PyTorch module (dropout = eval identity)."""
    B, L, D = query.shape
    d_k = D // h

    def lin(x, w, b):
        return jnp.einsum("bld,od->blo", x, w) + b

    Q = lin(query, params["wq"], params["bq"]).reshape(B, L, h, d_k).transpose(0, 2, 1, 3)
    K = lin(key, params["wk"], params["bk"]).reshape(B, L, h, d_k).transpose(0, 2, 1, 3)
    V = lin(value, params["wv"], params["bv"]).reshape(B, L, h, d_k).transpose(0, 2, 1, 3)
    s = jnp.einsum("bhqd,bhkd->bhqk", Q, K) / math.sqrt(d_k)
    p = jax.nn.softmax(s, axis=-1)
    ctx = jnp.einsum("bhqk,bhkd->bhqd", p, V).transpose(0, 2, 1, 3).reshape(B, L, D)
    return jnp.einsum("bld,od->blo", ctx, params["wo"]) + params["bo"]


if __name__ == "__main__":
    # Small shapes consistent with the module: h=4, d_model=32, seq=8, batch=2.
    B, L, D, H = 2, 8, 32, 4

    key = jax.random.PRNGKey(0)
    ks = jax.random.split(key, 12)
    bound = 1.0 / math.sqrt(D)

    params = {
        "wq": jax.random.uniform(ks[0], (D, D), jnp.float32, -bound, bound),
        "bq": jax.random.uniform(ks[1], (D,), jnp.float32, -bound, bound),
        "wk": jax.random.uniform(ks[2], (D, D), jnp.float32, -bound, bound),
        "bk": jax.random.uniform(ks[3], (D,), jnp.float32, -bound, bound),
        "wv": jax.random.uniform(ks[4], (D, D), jnp.float32, -bound, bound),
        "bv": jax.random.uniform(ks[5], (D,), jnp.float32, -bound, bound),
        "wo": jax.random.uniform(ks[6], (D, D), jnp.float32, -bound, bound),
        "bo": jax.random.uniform(ks[7], (D,), jnp.float32, -bound, bound),
    }

    q = jax.random.normal(ks[8], (B, L, D), jnp.float32)
    k = jax.random.normal(ks[9], (B, L, D), jnp.float32)
    v = jax.random.normal(ks[10], (B, L, D), jnp.float32)

    out = multi_head_attention(q, k, v, params, H)
    out = jax.block_until_ready(out)

    ref = reference_mha(q, k, v, params, H)
    assert out.shape == (B, L, D)
    # Exact reciprocal + exact bias/scale folds -> tight tolerance.
    assert jnp.allclose(out, ref, atol=1e-4, rtol=1e-4), "mismatch vs reference"

    print("KERNEL_OK")
</pallas_src>

<mosaic_0001>
module attributes {stable_mosaic.version = 11 : i64} {
  func.func @kernel(%arg0: i32, %arg1: i32, %arg2: memref<1x8x32xf32, #tpu.memory_space<vmem>>, %arg3: memref<1x8x32xf32, #tpu.memory_space<vmem>>, %arg4: memref<1x8x32xf32, #tpu.memory_space<vmem>>, %arg5: memref<32x32xf32, #tpu.memory_space<vmem>>, %arg6: memref<32x32xf32, #tpu.memory_space<vmem>>, %arg7: memref<32x32xf32, #tpu.memory_space<vmem>>, %arg8: memref<32x32xf32, #tpu.memory_space<vmem>>, %arg9: memref<1x32xf32, #tpu.memory_space<vmem>>, %arg10: memref<1x32xf32, #tpu.memory_space<vmem>>, %arg11: memref<1x8x32xf32, #tpu.memory_space<vmem>>) attributes {dimension_semantics = [#tpu.dimension_semantics<parallel>, #tpu.dimension_semantics<parallel>], iteration_bounds = array<i64: 2, 1>, scalar_prefetch = 0 : i64, scratch_operands = 0 : i64, tpu.core_type = #tpu.core_type<tc>, window_params = [{transform_indices = @transform_0, window_bounds = array<i64: 1, 8, 32>}, {transform_indices = @transform_1, window_bounds = array<i64: 1, 8, 32>}, {transform_indices = @transform_2, window_bounds = array<i64: 1, 8, 32>}, {pipeline_mode = #tpu.pipeline_mode<synchronous>, transform_indices = @transform_3, window_bounds = array<i64: 32, 32>}, {pipeline_mode = #tpu.pipeline_mode<synchronous>, transform_indices = @transform_4, window_bounds = array<i64: 32, 32>}, {pipeline_mode = #tpu.pipeline_mode<synchronous>, transform_indices = @transform_5, window_bounds = array<i64: 32, 32>}, {pipeline_mode = #tpu.pipeline_mode<synchronous>, transform_indices = @transform_6, window_bounds = array<i64: 32, 32>}, {pipeline_mode = #tpu.pipeline_mode<synchronous>, transform_indices = @transform_7, window_bounds = array<i64: 1, 32>}, {pipeline_mode = #tpu.pipeline_mode<synchronous>, transform_indices = @transform_8, window_bounds = array<i64: 1, 32>}, {transform_indices = @transform_9, window_bounds = array<i64: 1, 8, 32>}]} {
    %c0 = arith.constant 0 : index
    %c0_0 = arith.constant 0 : index
    %c0_1 = arith.constant 0 : index
    %0 = vector.load %arg2[%c0, %c0_0, %c0_1] : memref<1x8x32xf32, #tpu.memory_space<vmem>>, vector<1x8x32xf32>
    %1 = vector.shape_cast %0 : vector<1x8x32xf32> to vector<8x32xf32>
    %c0_2 = arith.constant 0 : index
    %c0_3 = arith.constant 0 : index
    %2 = vector.load %arg5[%c0_2, %c0_3] : memref<32x32xf32, #tpu.memory_space<vmem>>, vector<32x32xf32>
    %cst = arith.constant dense<0.000000e+00> : vector<8x32xf32>
    %3 = tpu.matmul %1, %2, %cst {dimension_numbers = #tpu.dot_dimension_numbers<[1], [0], [0], [1], [0, 0, 1, 1], [], []>} : vector<8x32xf32>, vector<32x32xf32>, vector<8x32xf32> -> vector<8x32xf32>
    %c0_4 = arith.constant 0 : index
    %c0_5 = arith.constant 0 : index
    %4 = vector.load %arg9[%c0_4, %c0_5] : memref<1x32xf32, #tpu.memory_space<vmem>>, vector<1x32xf32>
    %5 = vector.broadcast %4 : vector<1x32xf32> to vector<8x32xf32>
    %6 = arith.addf %3, %5 : vector<8x32xf32>
    %c0_6 = arith.constant 0 : index
    %c0_7 = arith.constant 0 : index
    %c0_8 = arith.constant 0 : index
    %7 = vector.load %arg3[%c0_6, %c0_7, %c0_8] : memref<1x8x32xf32, #tpu.memory_space<vmem>>, vector<1x8x32xf32>
    %8 = vector.shape_cast %7 : vector<1x8x32xf32> to vector<8x32xf32>
    %c0_9 = arith.constant 0 : index
    %c0_10 = arith.constant 0 : index
    %9 = vector.load %arg6[%c0_9, %c0_10] : memref<32x32xf32, #tpu.memory_space<vmem>>, vector<32x32xf32>
    %cst_11 = arith.constant dense<0.000000e+00> : vector<8x32xf32>
    %10 = tpu.matmul %8, %9, %cst_11 {dimension_numbers = #tpu.dot_dimension_numbers<[1], [0], [0], [1], [0, 0, 1, 1], [], []>} : vector<8x32xf32>, vector<32x32xf32>, vector<8x32xf32> -> vector<8x32xf32>
    %c0_12 = arith.constant 0 : index
    %c0_13 = arith.constant 0 : index
    %c0_14 = arith.constant 0 : index
    %11 = vector.load %arg4[%c0_12, %c0_13, %c0_14] : memref<1x8x32xf32, #tpu.memory_space<vmem>>, vector<1x8x32xf32>
    %12 = vector.shape_cast %11 : vector<1x8x32xf32> to vector<8x32xf32>
    %c0_15 = arith.constant 0 : index
    %c0_16 = arith.constant 0 : index
    %13 = vector.load %arg7[%c0_15, %c0_16] : memref<32x32xf32, #tpu.memory_space<vmem>>, vector<32x32xf32>
    %cst_17 = arith.constant dense<0.000000e+00> : vector<8x32xf32>
    %14 = tpu.matmul %12, %13, %cst_17 {dimension_numbers = #tpu.dot_dimension_numbers<[1], [0], [0], [1], [0, 0, 1, 1], [], []>} : vector<8x32xf32>, vector<32x32xf32>, vector<8x32xf32> -> vector<8x32xf32>
    %15 = vector.shape_cast %6 : vector<8x32xf32> to vector<8x4x8xf32>
    %16 = vector.shape_cast %10 : vector<8x32xf32> to vector<8x4x8xf32>
    %17 = vector.shape_cast %14 : vector<8x32xf32> to vector<8x4x8xf32>
    "tpu.trace_start"() <{level = 10 : i32, message = "qhd,khd->hqk"}> : () -> ()
    %cst_18 = arith.constant dense<0.000000e+00> : vector<4x8x8xf32>
    %18 = tpu.matmul %15, %16, %cst_18 {dimension_numbers = #tpu.dot_dimension_numbers<[2], [2], [0], [0], [0, 1, 0, 0, 1, 0], [1], [1]>} : vector<8x4x8xf32>, vector<8x4x8xf32>, vector<4x8x8xf32> -> vector<4x8x8xf32>
    "tpu.trace_stop"() : () -> ()
    %cst_19 = arith.constant dense<0xFF800000> : vector<4x8xf32>
    %19 = vector.multi_reduction <maximumf>, %18, %cst_19 [2] : vector<4x8x8xf32> to vector<4x8xf32>
    %20 = vector.shape_cast %19 : vector<4x8xf32> to vector<4x8x1xf32>
    %21 = vector.broadcast %20 : vector<4x8x1xf32> to vector<4x8x8xf32>
    %22 = arith.subf %18, %21 : vector<4x8x8xf32>
    %23 = math.exp %22 : vector<4x8x8xf32>
    %cst_20 = arith.constant dense<0.000000e+00> : vector<4x8xf32>
    %24 = vector.multi_reduction <add>, %23, %cst_20 [2] : vector<4x8x8xf32> to vector<4x8xf32>
    "tpu.trace_start"() <{level = 10 : i32, message = "hqk,khd->qhd"}> : () -> ()
    %cst_21 = arith.constant dense<0.000000e+00> : vector<4x8x8xf32>
    %25 = tpu.matmul %17, %23, %cst_21 {dimension_numbers = #tpu.dot_dimension_numbers<[0], [2], [2], [1], [0, 1, 0, 2, 1, 1], [1], [0]>} : vector<8x4x8xf32>, vector<4x8x8xf32>, vector<4x8x8xf32> -> vector<4x8x8xf32>
    %26 = tpu.transpose %25, [2, 0, 1] : vector<4x8x8xf32> -> vector<8x4x8xf32>
    "tpu.trace_stop"() : () -> ()
    %27 = tpu.reciprocal %24 : vector<4x8xf32> -> vector<4x8xf32>
    %28 = tpu.transpose %27, [1, 0] : vector<4x8xf32> -> vector<8x4xf32>
    %29 = vector.shape_cast %28 : vector<8x4xf32> to vector<8x4x1xf32>
    %30 = vector.broadcast %29 : vector<8x4x1xf32> to vector<8x4x8xf32>
    %31 = arith.mulf %26, %30 : vector<8x4x8xf32>
    %32 = vector.shape_cast %31 : vector<8x4x8xf32> to vector<8x32xf32>
    %c0_22 = arith.constant 0 : index
    %c0_23 = arith.constant 0 : index
    %33 = vector.load %arg8[%c0_22, %c0_23] : memref<32x32xf32, #tpu.memory_space<vmem>>, vector<32x32xf32>
    %cst_24 = arith.constant dense<0.000000e+00> : vector<8x32xf32>
    %34 = tpu.matmul %32, %33, %cst_24 {dimension_numbers = #tpu.dot_dimension_numbers<[1], [0], [0], [1], [0, 0, 1, 1], [], []>} : vector<8x32xf32>, vector<32x32xf32>, vector<8x32xf32> -> vector<8x32xf32>
    %c0_25 = arith.constant 0 : index
    %c0_26 = arith.constant 0 : index
    %35 = vector.load %arg10[%c0_25, %c0_26] : memref<1x32xf32, #tpu.memory_space<vmem>>, vector<1x32xf32>
    %36 = vector.broadcast %35 : vector<1x32xf32> to vector<8x32xf32>
    %37 = arith.addf %34, %36 : vector<8x32xf32>
    %c0_27 = arith.constant 0 : index
    %c0_28 = arith.constant 0 : index
    %c0_29 = arith.constant 0 : index
    %38 = vector.load %arg11[%c0_27, %c0_28, %c0_29] : memref<1x8x32xf32, #tpu.memory_space<vmem>>, vector<1x8x32xf32>
    %39 = vector.shape_cast %38 : vector<1x8x32xf32> to vector<8x32xf32>
    %40 = vector.shape_cast %37 : vector<8x32xf32> to vector<1x8x32xf32>
    tpu.vector_store %arg11[%c0_27, %c0_28, %c0_29], %40 {strides = array<i32>} : memref<1x8x32xf32, #tpu.memory_space<vmem>>, vector<1x8x32xf32>,
    return
  }
  func.func @transform_0(%arg0: i32, %arg1: i32) -> (i32, i32, i32) {
    %c0_i32 = arith.constant 0 : i32
    %c0_i32_0 = arith.constant 0 : i32
    return %arg0, %arg1, %c0_i32 : i32, i32, i32
  }
  func.func @transform_1(%arg0: i32, %arg1: i32) -> (i32, i32, i32) {
    %c0_i32 = arith.constant 0 : i32
    %c0_i32_0 = arith.constant 0 : i32
    %c0_i32_1 = arith.constant 0 : i32
    return %arg0, %c0_i32, %c0_i32_0 : i32, i32, i32
  }
  func.func @transform_2(%arg0: i32, %arg1: i32) -> (i32, i32, i32) {
    %c0_i32 = arith.constant 0 : i32
    %c0_i32_0 = arith.constant 0 : i32
    %c0_i32_1 = arith.constant 0 : i32
    return %arg0, %c0_i32, %c0_i32_0 : i32, i32, i32
  }
  func.func @transform_3(%arg0: i32, %arg1: i32) -> (i32, i32) {
    %c0_i32 = arith.constant 0 : i32
    %c0_i32_0 = arith.constant 0 : i32
    %c0_i32_1 = arith.constant 0 : i32
    return %c0_i32, %c0_i32_0 : i32, i32
  }
  func.func @transform_4(%arg0: i32, %arg1: i32) -> (i32, i32) {
    %c0_i32 = arith.constant 0 : i32
    %c0_i32_0 = arith.constant 0 : i32
    %c0_i32_1 = arith.constant 0 : i32
    return %c0_i32, %c0_i32_0 : i32, i32
  }
  func.func @transform_5(%arg0: i32, %arg1: i32) -> (i32, i32) {
    %c0_i32 = arith.constant 0 : i32
    %c0_i32_0 = arith.constant 0 : i32
    %c0_i32_1 = arith.constant 0 : i32
    return %c0_i32, %c0_i32_0 : i32, i32
  }
  func.func @transform_6(%arg0: i32, %arg1: i32) -> (i32, i32) {
    %c0_i32 = arith.constant 0 : i32
    %c0_i32_0 = arith.constant 0 : i32
    %c0_i32_1 = arith.constant 0 : i32
    return %c0_i32, %c0_i32_0 : i32, i32
  }
  func.func @transform_7(%arg0: i32, %arg1: i32) -> (i32, i32) {
    %c0_i32 = arith.constant 0 : i32
    %c0_i32_0 = arith.constant 0 : i32
    %c0_i32_1 = arith.constant 0 : i32
    return %c0_i32, %c0_i32_0 : i32, i32
  }
  func.func @transform_8(%arg0: i32, %arg1: i32) -> (i32, i32) {
    %c0_i32 = arith.constant 0 : i32
    %c0_i32_0 = arith.constant 0 : i32
    %c0_i32_1 = arith.constant 0 : i32
    return %c0_i32, %c0_i32_0 : i32, i32
  }
  func.func @transform_9(%arg0: i32, %arg1: i32) -> (i32, i32, i32) {
    %c0_i32 = arith.constant 0 : i32
    %c0_i32_0 = arith.constant 0 : i32
    return %arg0, %arg1, %c0_i32 : i32, i32, i32
  }
}

</mosaic_0001>

<llo_original>
// kernel: tpu_custom_call.1
$region0: #{tpu_custom_call.1}
  #allocation0 [shape = 'u32[]', space=smem, size = 0x4, offset = 0x4, fixed_abs, tag = 'smem constant byte address 0x4 - core index']
  #allocation1 [shape = 'u32[72,128]{1,0:T(1,128)}', space=vmem, size = 0x9000, scoped, tag = 'internal scratch']
  %s0 = inlined_call_operand.hbm [shape: f32[2,8,32], index: 0, kind: input, shape index: {}]
  %s1 = inlined_call_operand.hbm [shape: f32[2,8,32], index: 1, kind: input, shape index: {}]
  %s2 = inlined_call_operand.hbm [shape: f32[2,8,32], index: 2, kind: input, shape index: {}]
  %s3 = inlined_call_operand.hbm [shape: f32[32,32], index: 3, kind: input, shape index: {}]
  %s4 = inlined_call_operand.hbm [shape: f32[32,32], index: 4, kind: input, shape index: {}]
  %s5 = inlined_call_operand.hbm [shape: f32[32,32], index: 5, kind: input, shape index: {}]
  %s6 = inlined_call_operand.hbm [shape: f32[32,32], index: 6, kind: input, shape index: {}]
  %s7 = inlined_call_operand.vmem [shape: f32[1,32], index: 7, kind: input, shape index: {}]
  %s8 = inlined_call_operand.vmem [shape: f32[1,32], index: 8, kind: input, shape index: {}]
  %s9 = inlined_call_operand.hbm [shape: f32[2,8,32], index: 9, kind: output, shape index: {}]
  %s10 = sld [smem:[#allocation0]]
  $region97: #{tpu_custom_call.1} parent=0
    _
  %s12 = ssub.s32 1, %s10
  %s13 = scalar_select 0, %s12, %s10
  $region1: #{tpu_custom_call.1} parent=0
    #allocation2 [shape = 'u8[8192]{0}', space=vmem, size = 0x2000, scoped, tag = 'input window, operand 0']
    #allocation3 [shape = 's32[2]{0}', space=sflag, size = 0x8, scoped, tag = 'scoped memory for tpu_custom_call.1']
    #allocation4 [shape = 's32[2]{0}', space=sflag, size = 0x8, scoped, tag = 'scoped memory for tpu_custom_call.1']
    #allocation5 [shape = 'u8[8192]{0}', space=vmem, size = 0x2000, scoped, tag = 'input window, operand 1']
    #allocation6 [shape = 's32[2]{0}', space=sflag, size = 0x8, scoped, tag = 'scoped memory for tpu_custom_call.1']
    #allocation7 [shape = 'u8[8192]{0}', space=vmem, size = 0x2000, scoped, tag = 'input window, operand 2']
    #allocation8 [shape = 'u8[16384]{0}', space=vmem, size = 0x4000, scoped, tag = 'input window, operand 3, single buffered']
    #allocation9 [shape = 's32[1]{0}', space=sflag, size = 0x4, scoped, tag = 'scoped memory for tpu_custom_call.1']
    #allocation10 [shape = 'u8[16384]{0}', space=vmem, size = 0x4000, scoped, tag = 'input window, operand 4, single buffered']
    #allocation11 [shape = 'u8[16384]{0}', space=vmem, size = 0x4000, scoped, tag = 'input window, operand 5, single buffered']
    #allocation12 [shape = 's32[1]{0}', space=sflag, size = 0x4, scoped, tag = 'scoped memory for tpu_custom_call.1']
    #allocation13 [shape = 'u8[16384]{0}', space=vmem, size = 0x4000, scoped, tag = 'input window, operand 6, single buffered']
    #allocation14 [shape = 'u8[8192]{0}', space=vmem, size = 0x2000, scoped, tag = 'output window, operand 0']
    %14 = vsyncpa [#allocation3], 0
    %s15 = scalar_lea.sflag [#allocation3], 1
    %16 = vsyncpa %s15, 0
    %17 = vsyncpa [#allocation6], 0
    %s18 = scalar_lea.sflag [#allocation6], 1
    %19 = vsyncpa %s18, 0
    %20 = vsyncpa [#allocation9], 0
    %21 = vsyncpa [#allocation12], 0
    %22 = vsyncpa [#allocation4], 0
    %s23 = scalar_lea.sflag [#allocation4], 1
    %24 = vsyncpa %s23, 0
    loop: start=0, step=1, limit=4
    $region2: #{tpu_custom_call.1} parent=1 // loop_pre_header
      _
    $region3: #{tpu_custom_call.1} parent=1 // loop_header
      %s26 = sphi 0, %s30
      %p27 = scmp.ge.s32.totalorder %s26, 4
      %s33 = sphi 0, %s45
      %s34 = sphi 0, %s41
      %s35 = sphi 0, %s33
      %s36 = sphi 0, %s34
      %s37 = sphi 0, %s35
      %s38 = sphi 0, %s36
      %s50 = sphi 0, %s52
      %s53 = sphi 0, %s50
      %s54 = sphi 0, %s53
      %s70 = sphi 0, %s54
      %s76 = sphi 0, %s78
      %s79 = sphi 0, %s76
      %s80 = sphi 0, %s79
      %s96 = sphi 0, %s80
      %s102 = sphi 0, %s104
      %s105 = sphi 0, %s102
      %s106 = sphi 0, %s105
      %s122 = sphi 0, %s106
      %s126 = sphi 0, %s126
      %s128 = sphi 0, %s126
      %s129 = sphi 0, %s128
      %s143 = sphi 0, %s129
      %s147 = sphi 0, %s147
      %s149 = sphi 0, %s147
      %s150 = sphi 0, %s149
      %s164 = sphi 0, %s150
      %s168 = sphi 0, %s168
      %s170 = sphi 0, %s168
      %s171 = sphi 0, %s170
      %s185 = sphi 0, %s171
      %s189 = sphi 0, %s189
      %s191 = sphi 0, %s189
      %s192 = sphi 0, %s191
      %s206 = sphi 0, %s192
      %s210 = sphi 0, %s210
      %s212 = sphi 0, %s210
      %s213 = sphi 0, %s212
      %s227 = sphi 0, %s213
      %s231 = sphi 0, %s231
      %s233 = sphi 0, %s231
      %s234 = sphi 0, %s233
      %s248 = sphi 0, %s234
      %s256 = sphi 0, %s258
      %s259 = sphi 0, %s256
      %s260 = sphi 0, %s259
      %s276 = sphi 0, %s260
    $region4: #{tpu_custom_call.1} parent=1 // loop_header_branch
      %29 = sbr.rel (%p27) target = $region8
    $region5: #{tpu_custom_call.1} parent=1 // loop_body
      %s31 = ssub.s32 %s26, 1
      %s32 = ssub.s32 %s26, 2
      %s39 = sadd.s32 1, %s34
      %p40 = scmp.ge.s32.totalorder %s39, 1
      %s41 = scalar_select %p40, 0, %s39
      %s42 = sadd.s32 1, %s33
      %s43 = scalar_select %p40, %s42, %s33
      %p44 = scmp.ge.s32.totalorder %s43, 2
      %s45 = scalar_select %p44, 0, %s43
      %s46 = ssub.s32 %s33, %s45
      %s47 = ssub.s32 %s34, %s41
      %s48 = sor.u32 %s46, %s47
      %p49 = scmp.eq.s32.totalorder %s48, 0
      %s51 = sadd.s32 %s50, 1
      %s52 = scalar_select %p49, %s50, %s51
      %p55 = pneg %p49
      %p56 = scmp.eq.s32.totalorder %s26, 1
      %p57 = por %p55, %p56
      %p58 = scmp.ne.s32.totalorder %s50, %s53
      %p59 = scmp.eq.s32.totalorder %s26, 0
      %p60 = por %p58, %p59
      %p61 = scmp.ne.s32.totalorder %s50, %s53
      %p62 = scmp.eq.s32.totalorder %s31, 1
      %p63 = por %p61, %p62
      %p64 = scmp.ne.s32.totalorder %s53, %s54
      %p65 = scmp.eq.s32.totalorder %s31, 0
      %p66 = por %p64, %p65
      %p67 = scmp.ne.s32.totalorder %s53, %s54
      %p68 = scmp.eq.s32.totalorder %s32, 1
      %p69 = por %p67, %p68
      %p71 = scmp.ne.s32.totalorder %s54, %s70
      %p72 = scmp.eq.s32.totalorder %s32, 0
      %p73 = por %p71, %p72
      %s74 = ssub.s32 %s33, %s45
      %p75 = scmp.eq.s32.totalorder %s74, 0
      %s77 = sadd.s32 %s76, 1
      %s78 = scalar_select %p75, %s76, %s77
      %p81 = pneg %p75
      %p82 = scmp.eq.s32.totalorder %s26, 1
      %p83 = por %p81, %p82
      %p84 = scmp.ne.s32.totalorder %s76, %s79
      %p85 = scmp.eq.s32.totalorder %s26, 0
      %p86 = por %p84, %p85
      %p87 = scmp.ne.s32.totalorder %s76, %s79
      %p88 = scmp.eq.s32.totalorder %s31, 1
      %p89 = por %p87, %p88
      %p90 = scmp.ne.s32.totalorder %s79, %s80
      %p91 = scmp.eq.s32.totalorder %s31, 0
      %p92 = por %p90, %p91
      %p93 = scmp.ne.s32.totalorder %s79, %s80
      %p94 = scmp.eq.s32.totalorder %s32, 1
      %p95 = por %p93, %p94
      %p97 = scmp.ne.s32.totalorder %s80, %s96
      %p98 = scmp.eq.s32.totalorder %s32, 0
      %p99 = por %p97, %p98
      %s100 = ssub.s32 %s33, %s45
      %p101 = scmp.eq.s32.totalorder %s100, 0
      %s103 = sadd.s32 %s102, 1
      %s104 = scalar_select %p101, %s102, %s103
      %p107 = pneg %p101
      %p108 = scmp.eq.s32.totalorder %s26, 1
      %p109 = por %p107, %p108
      %p110 = scmp.ne.s32.totalorder %s102, %s105
      %p111 = scmp.eq.s32.totalorder %s26, 0
      %p112 = por %p110, %p111
      %p113 = scmp.ne.s32.totalorder %s102, %s105
      %p114 = scmp.eq.s32.totalorder %s31, 1
      %p115 = por %p113, %p114
      %p116 = scmp.ne.s32.totalorder %s105, %s106
      %p117 = scmp.eq.s32.totalorder %s31, 0
      %p118 = por %p116, %p117
      %p119 = scmp.ne.s32.totalorder %s105, %s106
      %p120 = scmp.eq.s32.totalorder %s32, 1
      %p121 = por %p119, %p120
      %p123 = scmp.ne.s32.totalorder %s106, %s122
      %p124 = scmp.eq.s32.totalorder %s32, 0
      %p125 = por %p123, %p124
      %s127 = sadd.s32 %s126, 1
      %p130 = scmp.eq.s32.totalorder %s26, 1
      %p131 = scmp.ne.s32.totalorder %s126, %s128
      %p132 = scmp.eq.s32.totalorder %s26, 0
      %p133 = por %p131, %p132
      %p134 = scmp.ne.s32.totalorder %s126, %s128
      %p135 = scmp.eq.s32.totalorder %s31, 1
      %p136 = por %p134, %p135
      %p137 = scmp.ne.s32.totalorder %s128, %s129
      %p138 = scmp.eq.s32.totalorder %s31, 0
      %p139 = por %p137, %p138
      %p140 = scmp.ne.s32.totalorder %s128, %s129
      %p141 = scmp.eq.s32.totalorder %s32, 1
      %p142 = por %p140, %p141
      %p144 = scmp.ne.s32.totalorder %s129, %s143
      %p145 = scmp.eq.s32.totalorder %s32, 0
      %p146 = por %p144, %p145
      %s148 = sadd.s32 %s147, 1
      %p151 = scmp.eq.s32.totalorder %s26, 1
      %p152 = scmp.ne.s32.totalorder %s147, %s149
      %p153 = scmp.eq.s32.totalorder %s26, 0
      %p154 = por %p152, %p153
      %p155 = scmp.ne.s32.totalorder %s147, %s149
      %p156 = scmp.eq.s32.totalorder %s31, 1
      %p157 = por %p155, %p156
      %p158 = scmp.ne.s32.totalorder %s149, %s150
      %p159 = scmp.eq.s32.totalorder %s31, 0
      %p160 = por %p158, %p159
      %p161 = scmp.ne.s32.totalorder %s149, %s150
      %p162 = scmp.eq.s32.totalorder %s32, 1
      %p163 = por %p161, %p162
      %p165 = scmp.ne.s32.totalorder %s150, %s164
      %p166 = scmp.eq.s32.totalorder %s32, 0
      %p167 = por %p165, %p166
      %s169 = sadd.s32 %s168, 1
      %p172 = scmp.eq.s32.totalorder %s26, 1
      %p173 = scmp.ne.s32.totalorder %s168, %s170
      %p174 = scmp.eq.s32.totalorder %s26, 0
      %p175 = por %p173, %p174
      %p176 = scmp.ne.s32.totalorder %s168, %s170
      %p177 = scmp.eq.s32.totalorder %s31, 1
      %p178 = por %p176, %p177
      %p179 = scmp.ne.s32.totalorder %s170, %s171
      %p180 = scmp.eq.s32.totalorder %s31, 0
      %p181 = por %p179, %p180
      %p182 = scmp.ne.s32.totalorder %s170, %s171
      %p183 = scmp.eq.s32.totalorder %s32, 1
      %p184 = por %p182, %p183
      %p186 = scmp.ne.s32.totalorder %s171, %s185
      %p187 = scmp.eq.s32.totalorder %s32, 0
      %p188 = por %p186, %p187
      %s190 = sadd.s32 %s189, 1
      %p193 = scmp.eq.s32.totalorder %s26, 1
      %p194 = scmp.ne.s32.totalorder %s189, %s191
      %p195 = scmp.eq.s32.totalorder %s26, 0
      %p196 = por %p194, %p195
      %p197 = scmp.ne.s32.totalorder %s189, %s191
      %p198 = scmp.eq.s32.totalorder %s31, 1
      %p199 = por %p197, %p198
      %p200 = scmp.ne.s32.totalorder %s191, %s192
      %p201 = scmp.eq.s32.totalorder %s31, 0
      %p202 = por %p200, %p201
      %p203 = scmp.ne.s32.totalorder %s191, %s192
      %p204 = scmp.eq.s32.totalorder %s32, 1
      %p205 = por %p203, %p204
      %p207 = scmp.ne.s32.totalorder %s192, %s206
      %p208 = scmp.eq.s32.totalorder %s32, 0
      %p209 = por %p207, %p208
      %s211 = sadd.s32 %s210, 1
      %p214 = scmp.eq.s32.totalorder %s26, 1
      %p215 = scmp.ne.s32.totalorder %s210, %s212
      %p216 = scmp.eq.s32.totalorder %s26, 0
      %p217 = por %p215, %p216
      %p218 = scmp.ne.s32.totalorder %s210, %s212
      %p219 = scmp.eq.s32.totalorder %s31, 1
      %p220 = por %p218, %p219
      %p221 = scmp.ne.s32.totalorder %s212, %s213
      %p222 = scmp.eq.s32.totalorder %s31, 0
      %p223 = por %p221, %p222
      %p224 = scmp.ne.s32.totalorder %s212, %s213
      %p225 = scmp.eq.s32.totalorder %s32, 1
      %p226 = por %p224, %p225
      %p228 = scmp.ne.s32.totalorder %s213, %s227
      %p229 = scmp.eq.s32.totalorder %s32, 0
      %p230 = por %p228, %p229
      %s232 = sadd.s32 %s231, 1
      %p235 = scmp.eq.s32.totalorder %s26, 1
      %p236 = scmp.ne.s32.totalorder %s231, %s233
      %p237 = scmp.eq.s32.totalorder %s26, 0
      %p238 = por %p236, %p237
      %p239 = scmp.ne.s32.totalorder %s231, %s233
      %p240 = scmp.eq.s32.totalorder %s31, 1
      %p241 = por %p239, %p240
      %p242 = scmp.ne.s32.totalorder %s233, %s234
      %p243 = scmp.eq.s32.totalorder %s31, 0
      %p244 = por %p242, %p243
      %p245 = scmp.ne.s32.totalorder %s233, %s234
      %p246 = scmp.eq.s32.totalorder %s32, 1
      %p247 = por %p245, %p246
      %p249 = scmp.ne.s32.totalorder %s234, %s248
      %p250 = scmp.eq.s32.totalorder %s32, 0
      %p251 = por %p249, %p250
      %s252 = ssub.s32 %s33, %s45
      %s253 = ssub.s32 %s34, %s41
      %s254 = sor.u32 %s252, %s253
      %p255 = scmp.eq.s32.totalorder %s254, 0
      %s257 = sadd.s32 %s256, 1
      %s258 = scalar_select %p255, %s256, %s257
      %p261 = pneg %p255
      %p262 = scmp.eq.s32.totalorder %s26, 1
      %p263 = por %p261, %p262
      %p264 = scmp.ne.s32.totalorder %s256, %s259
      %p265 = scmp.eq.s32.totalorder %s26, 0
      %p266 = por %p264, %p265
      %p267 = scmp.ne.s32.totalorder %s256, %s259
      %p268 = scmp.eq.s32.totalorder %s31, 1
      %p269 = por %p267, %p268
      %p270 = scmp.ne.s32.totalorder %s259, %s260
      %p271 = scmp.eq.s32.totalorder %s31, 0
      %p272 = por %p270, %p271
      %p273 = scmp.ne.s32.totalorder %s259, %s260
      %p274 = scmp.eq.s32.totalorder %s32, 1
      %p275 = por %p273, %p274
      %p277 = scmp.ne.s32.totalorder %s260, %s276
      %p278 = scmp.eq.s32.totalorder %s32, 0
      %p279 = por %p277, %p278
      %p280 = scmp.le.s32.totalorder 1, %s26
      %p281 = scmp.lt.s32.totalorder %s26, 3
      %p282 = pnand %p280, %p281
      %p283 = pneg %p282
      // Predicated region
      $region9: #{tpu_custom_call.1} parent=5 // pred_check
        _
      $region10: #{tpu_custom_call.1} parent=5 // pred_check_branch
        %285 = sbr.rel (%p282) target = $region12
      $region11: #{tpu_custom_call.1} parent=5 // pred_region
        %s286 = ssub.s32 %s26, 1
        // Predicated region
        $region13: #{tpu_custom_call.1} parent=11 // pred_check
          %p287 = pneg %p139
        $region14: #{tpu_custom_call.1} parent=11 // pred_check_branch
          %289 = sbr.rel (%p287) target = $region16
        $region15: #{tpu_custom_call.1} parent=11 // pred_region
          %291 = vsyncadd [#allocation9], 0
          %s292 = sshll.u32 %s3, 4
          %s293 = int_to_ptr.hbm [resolvable:$true] %s292
          %s294 = sshll.u32 [#allocation8], 4
          %s295 = int_to_ptr.vmem [resolvable:$true] %s294
          %300 = dma.hbm_to_vmem [thread:$0]  %s293, 512, %s295, [#allocation9], 128, 128, 8
        $region16: #{tpu_custom_call.1} parent=11 // pred_fallthru
          _
        // Predicated region
        $region17: #{tpu_custom_call.1} parent=11 // pred_check
          %p301 = pneg %p160
        $region18: #{tpu_custom_call.1} parent=11 // pred_check_branch
          %303 = sbr.rel (%p301) target = $region20
        $region19: #{tpu_custom_call.1} parent=11 // pred_region
          %305 = vsyncadd [#allocation9], 0
          %s306 = sshll.u32 %s4, 4
          %s307 = int_to_ptr.hbm [resolvable:$true] %s306
          %s308 = sshll.u32 [#allocation10], 4
          %s309 = int_to_ptr.vmem [resolvable:$true] %s308
          %314 = dma.hbm_to_vmem [thread:$0]  %s307, 512, %s309, [#allocation9], 128, 128, 8
        $region20: #{tpu_custom_call.1} parent=11 // pred_fallthru
          _
        // Predicated region
        $region21: #{tpu_custom_call.1} parent=11 // pred_check
          %p315 = pneg %p181
        $region22: #{tpu_custom_call.1} parent=11 // pred_check_branch
          %317 = sbr.rel (%p315) target = $region24
        $region23: #{tpu_custom_call.1} parent=11 // pred_region
          %319 = vsyncadd [#allocation12], 0
          %s320 = sshll.u32 %s5, 4
          %s321 = int_to_ptr.hbm [resolvable:$true] %s320
          %s322 = sshll.u32 [#allocation11], 4
          %s323 = int_to_ptr.vmem [resolvable:$true] %s322
          %328 = dma.hbm_to_vmem [thread:$0]  %s321, 512, %s323, [#allocation12], 128, 128, 8
        $region24: #{tpu_custom_call.1} parent=11 // pred_fallthru
          _
        // Predicated region
        $region25: #{tpu_custom_call.1} parent=11 // pred_check
          %p329 = pneg %p202
        $region26: #{tpu_custom_call.1} parent=11 // pred_check_branch
          %331 = sbr.rel (%p329) target = $region28
        $region27: #{tpu_custom_call.1} parent=11 // pred_region
          %333 = vsyncadd [#allocation12], 0
          %s334 = sshll.u32 %s6, 4
          %s335 = int_to_ptr.hbm [resolvable:$true] %s334
          %s336 = sshll.u32 [#allocation13], 4
          %s337 = int_to_ptr.vmem [resolvable:$true] %s336
          %342 = dma.hbm_to_vmem [thread:$0]  %s335, 512, %s337, [#allocation12], 128, 128, 8
        $region28: #{tpu_custom_call.1} parent=11 // pred_fallthru
          _
        // Predicated region
        $region29: #{tpu_custom_call.1} parent=11 // pred_check
          %p343 = pneg %p223
        $region30: #{tpu_custom_call.1} parent=11 // pred_check_branch
          %345 = sbr.rel (%p343) target = $region32
        $region31: #{tpu_custom_call.1} parent=11 // pred_region
          _
        $region32: #{tpu_custom_call.1} parent=11 // pred_fallthru
          _
        // Predicated region
        $region33: #{tpu_custom_call.1} parent=11 // pred_check
          %p346 = pneg %p244
        $region34: #{tpu_custom_call.1} parent=11 // pred_check_branch
          %348 = sbr.rel (%p346) target = $region36
        $region35: #{tpu_custom_call.1} parent=11 // pred_region
          _
        $region36: #{tpu_custom_call.1} parent=11 // pred_fallthru
          _
      $region12: #{tpu_custom_call.1} parent=5 // pred_fallthru
        _
      %p349 = scmp.lt.s32.totalorder %s26, 2
      // Predicated region
      $region37: #{tpu_custom_call.1} parent=5 // pred_check
        %p350 = pneg %p349
      $region38: #{tpu_custom_call.1} parent=5 // pred_check_branch
        %352 = sbr.rel (%p350) target = $region40
      $region39: #{tpu_custom_call.1} parent=5 // pred_region
        // Predicated region
        $region41: #{tpu_custom_call.1} parent=39 // pred_check
          %p353 = pneg %p60
        $region42: #{tpu_custom_call.1} parent=39 // pred_check_branch
          %355 = sbr.rel (%p353) target = $region44
        $region43: #{tpu_custom_call.1} parent=39 // pred_region
          %s356 = sand.u32 %s50, 1
          %s357 = scalar_lea.sflag [#allocation3], %s356
          %s358 = sand.u32 %s50, 1
          %s359 = smul.addr %s358, 8
          %s360 = scalar_lea.vmem [#allocation2], %s359
          %362 = vsyncadd %s357, 0
          %s363 = sadd.s32 %s34, %s33
          %s364 = smul.addr %s363, 8
          %s365 = scalar_lea.hbm %s0, %s364
          %s367 = sshll.u32 %s365, 4
          %s368 = int_to_ptr.hbm [resolvable:$true] %s367
          %s369 = sshll.u32 %s360, 4
          %s370 = int_to_ptr.vmem [resolvable:$true] %s369
          %372 = dma.hbm_to_vmem [thread:$0]  %s368, 128, %s370, %s357
        $region44: #{tpu_custom_call.1} parent=39 // pred_fallthru
          _
        // Predicated region
        $region45: #{tpu_custom_call.1} parent=39 // pred_check
          %p373 = pneg %p86
        $region46: #{tpu_custom_call.1} parent=39 // pred_check_branch
          %375 = sbr.rel (%p373) target = $region48
        $region47: #{tpu_custom_call.1} parent=39 // pred_region
          %s376 = sand.u32 %s26, 1
          %s377 = scalar_lea.sflag [#allocation6], %s376
          %s378 = sand.u32 %s76, 1
          %s379 = smul.addr %s378, 8
          %s380 = scalar_lea.vmem [#allocation5], %s379
          %382 = vsyncadd %s377, 0
          %s383 = smul.addr %s33, 8
          %s384 = scalar_lea.hbm %s1, %s383
          %s386 = sshll.u32 %s384, 4
          %s387 = int_to_ptr.hbm [resolvable:$true] %s386
          %s388 = sshll.u32 %s380, 4
          %s389 = int_to_ptr.vmem [resolvable:$true] %s388
          %391 = dma.hbm_to_vmem [thread:$0]  %s387, 128, %s389, %s377
        $region48: #{tpu_custom_call.1} parent=39 // pred_fallthru
          _
        // Predicated region
        $region49: #{tpu_custom_call.1} parent=39 // pred_check
          %p392 = pneg %p112
        $region50: #{tpu_custom_call.1} parent=39 // pred_check_branch
          %394 = sbr.rel (%p392) target = $region52
        $region51: #{tpu_custom_call.1} parent=39 // pred_region
          %s395 = sand.u32 %s26, 1
          %s396 = scalar_lea.sflag [#allocation6], %s395
          %s397 = sand.u32 %s102, 1
          %s398 = smul.addr %s397, 8
          %s399 = scalar_lea.vmem [#allocation7], %s398
          %401 = vsyncadd %s396, 0
          %s402 = smul.addr %s33, 8
          %s403 = scalar_lea.hbm %s2, %s402
          %s405 = sshll.u32 %s403, 4
          %s406 = int_to_ptr.hbm [resolvable:$true] %s405
          %s407 = sshll.u32 %s399, 4
          %s408 = int_to_ptr.vmem [resolvable:$true] %s407
          %410 = dma.hbm_to_vmem [thread:$0]  %s406, 128, %s408, %s396
        $region52: #{tpu_custom_call.1} parent=39 // pred_fallthru
          _
      $region40: #{tpu_custom_call.1} parent=5 // pred_fallthru
        _
      %p411 = scmp.le.s32.totalorder 1, %s26
      %p412 = scmp.lt.s32.totalorder %s26, 3
      %p413 = pnand %p411, %p412
      %p414 = pneg %p413
      // Predicated region
      $region53: #{tpu_custom_call.1} parent=5 // pred_check
        _
      $region54: #{tpu_custom_call.1} parent=5 // pred_check_branch
        %416 = sbr.rel (%p413) target = $region56
      $region55: #{tpu_custom_call.1} parent=5 // pred_region
        %s417 = ssub.s32 %s26, 1
        %s418 = sand.u32 %s53, 1
        %s419 = scalar_lea.sflag [#allocation3], %s418
        %s420 = sand.u32 %s53, 1
        %s421 = smul.addr %s420, 8
        %s422 = scalar_lea.vmem [#allocation2], %s421
        // Predicated region
        $region57: #{tpu_custom_call.1} parent=55 // pred_check
          %p423 = pneg %p66
        $region58: #{tpu_custom_call.1} parent=55 // pred_check_branch
          %425 = sbr.rel (%p423) target = $region60
        $region59: #{tpu_custom_call.1} parent=55 // pred_region
          %427 = dma.done %s419, 128
        $region60: #{tpu_custom_call.1} parent=55 // pred_fallthru
          _
        %s428 = sand.u32 %s31, 1
        %s429 = scalar_lea.sflag [#allocation6], %s428
        %s430 = sand.u32 %s79, 1
        %s431 = smul.addr %s430, 8
        %s432 = scalar_lea.vmem [#allocation5], %s431
        // Predicated region
        $region61: #{tpu_custom_call.1} parent=55 // pred_check
          %p433 = pneg %p92
        $region62: #{tpu_custom_call.1} parent=55 // pred_check_branch
          %435 = sbr.rel (%p433) target = $region64
        $region63: #{tpu_custom_call.1} parent=55 // pred_region
          %437 = dma.done %s429, 128
        $region64: #{tpu_custom_call.1} parent=55 // pred_fallthru
          _
        %s438 = sand.u32 %s31, 1
        %s439 = scalar_lea.sflag [#allocation6], %s438
        %s440 = sand.u32 %s105, 1
        %s441 = smul.addr %s440, 8
        %s442 = scalar_lea.vmem [#allocation7], %s441
        // Predicated region
        $region65: #{tpu_custom_call.1} parent=55 // pred_check
          %p443 = pneg %p118
        $region66: #{tpu_custom_call.1} parent=55 // pred_check_branch
          %445 = sbr.rel (%p443) target = $region68
        $region67: #{tpu_custom_call.1} parent=55 // pred_region
          %447 = dma.done %s439, 128
        $region68: #{tpu_custom_call.1} parent=55 // pred_fallthru
          _
        // Predicated region
        $region69: #{tpu_custom_call.1} parent=55 // pred_check
          %p448 = pneg %p139
        $region70: #{tpu_custom_call.1} parent=55 // pred_check_branch
          %450 = sbr.rel (%p448) target = $region72
        $region71: #{tpu_custom_call.1} parent=55 // pred_region
          %452 = dma.done [#allocation9], 512
        $region72: #{tpu_custom_call.1} parent=55 // pred_fallthru
          _
        // Predicated region
        $region73: #{tpu_custom_call.1} parent=55 // pred_check
          %p453 = pneg %p160
        $region74: #{tpu_custom_call.1} parent=55 // pred_check_branch
          %455 = sbr.rel (%p453) target = $region76
        $region75: #{tpu_custom_call.1} parent=55 // pred_region
          %457 = dma.done [#allocation9], 512
        $region76: #{tpu_custom_call.1} parent=55 // pred_fallthru
          _
        // Predicated region
        $region77: #{tpu_custom_call.1} parent=55 // pred_check
          %p458 = pneg %p181
        $region78: #{tpu_custom_call.1} parent=55 // pred_check_branch
          %460 = sbr.rel (%p458) target = $region80
        $region79: #{tpu_custom_call.1} parent=55 // pred_region
          %462 = dma.done [#allocation12], 512
        $region80: #{tpu_custom_call.1} parent=55 // pred_fallthru
          _
        // Predicated region
        $region81: #{tpu_custom_call.1} parent=55 // pred_check
          %p463 = pneg %p202
        $region82: #{tpu_custom_call.1} parent=55 // pred_check_branch
          %465 = sbr.rel (%p463) target = $region84
        $region83: #{tpu_custom_call.1} parent=55 // pred_region
          %467 = dma.done [#allocation12], 512
        $region84: #{tpu_custom_call.1} parent=55 // pred_fallthru
          _
        %s468 = sand.u32 %s53, 1
        %s469 = scalar_lea.sflag [#allocation3], %s468
        %s470 = sand.u32 %s53, 1
        %s471 = smul.addr %s470, 8
        %s472 = scalar_lea.vmem [#allocation2], %s471
        %p473 = pneg %p66
        %p474 = pneg %p63
        %s475 = sand.u32 %s31, 1
        %s476 = scalar_lea.sflag [#allocation6], %s475
        %s477 = sand.u32 %s79, 1
        %s478 = smul.addr %s477, 8
        %s479 = scalar_lea.vmem [#allocation5], %s478
        %p480 = pneg %p92
        %p481 = pneg %p89
        %s482 = sand.u32 %s31, 1
        %s483 = scalar_lea.sflag [#allocation6], %s482
        %s484 = sand.u32 %s105, 1
        %s485 = smul.addr %s484, 8
        %s486 = scalar_lea.vmem [#allocation7], %s485
        %p487 = pneg %p118
        %p488 = pneg %p115
        %p489 = pneg %p139
        %p490 = pneg %p136
        %p491 = pneg %p160
        %p492 = pneg %p157
        %p493 = pneg %p181
        %p494 = pneg %p178
        %p495 = pneg %p202
        %p496 = pneg %p199
        %p497 = pneg %p223
        %p498 = pneg %p220
        %p499 = pneg %p244
        %p500 = pneg %p241
        %p501 = pneg %p272
        %p502 = pneg %p269
        %s503 = sand.u32 %s259, 1
        %s504 = scalar_lea.sflag [#allocation4], %s503
        %s505 = sand.u32 %s259, 1
        %s506 = smul.addr %s505, 8
        %s507 = scalar_lea.vmem [#allocation14], %s506
        %v508 = vld [vmem:[%s422] sm:$0xff]
        %v509 = vld [vmem:[#allocation8] sm:$0xff]
        %v510 = vld [vmem:[#allocation8 + $0x8] sm:$0xff]
        %v511 = vld [vmem:[#allocation8 + $0x10] sm:$0xff]
        %v512 = vld [vmem:[#allocation8 + $0x18] sm:$0xff]
        %v513 = vld [vmem:[%s7] sm:$0x1]
        %v515 = vperm.slane %v513, 0
        %vm517 = vcmask 261120
        %v519 = vsel %vm517, %v508, 0
        %521 = vmatpush.msra.mxu0 0.0
        %522 = vmatpush.msra.mxu0 0.0
        %523 = vmatpush.msra.mxu0 0.0
        %524 = vmatpush.msra.mxu0 0.0
        %525 = vmatpush.msra.mxu0 0.0
        %526 = vmatpush.msra.mxu0 0.0
        %527 = vmatpush.msra.mxu0 0.0
        %528 = vmatpush.msra.mxu0 0.0
        %529 = vmatpush.msra.mxu0 0.0
        %530 = vmatpush.msra.mxu0 0.0
        %531 = vmatpush.msra.mxu0 0.0
        %532 = vmatpush.msra.mxu0 0.0
        %533 = vmatpush.msra.mxu0 %v512
        %534 = vmatpush.msra.mxu0 %v511
        %535 = vmatpush.msra.mxu0 %v510
        %536 = vmatpush.msra.mxu0 %v509
        %537 = vmatmul.f32.gmra.mxu0 %v519
        %v538 = vpop.f32.mrf.mxu0
        %v539 = vadd.f32 %v515, %v538
        %540 = vdwg.mxu0
        %v541 = vld [vmem:[%s432] sm:$0xff]
        %v542 = vld [vmem:[#allocation10] sm:$0xff]
        %v543 = vld [vmem:[#allocation10 + $0x8] sm:$0xff]
        %v544 = vld [vmem:[#allocation10 + $0x10] sm:$0xff]
        %v545 = vld [vmem:[#allocation10 + $0x18] sm:$0xff]
        %v547 = vsel %vm517, %v541, 0
        %549 = vmatpush.msra.mxu0 0.0
        %550 = vmatpush.msra.mxu0 0.0
        %551 = vmatpush.msra.mxu0 0.0
        %552 = vmatpush.msra.mxu0 0.0
        %553 = vmatpush.msra.mxu0 0.0
        %554 = vmatpush.msra.mxu0 0.0
        %555 = vmatpush.msra.mxu0 0.0
        %556 = vmatpush.msra.mxu0 0.0
        %557 = vmatpush.msra.mxu0 0.0
        %558 = vmatpush.msra.mxu0 0.0
        %559 = vmatpush.msra.mxu0 0.0
        %560 = vmatpush.msra.mxu0 0.0
        %561 = vmatpush.msra.mxu0 %v545
        %562 = vmatpush.msra.mxu0 %v544
        %563 = vmatpush.msra.mxu0 %v543
        %564 = vmatpush.msra.mxu0 %v542
        %565 = vmatmul.f32.gmra.mxu0 %v547
        %v566 = vpop.f32.mrf.mxu0
        %v567 = vadd.f32 0.0, %v566
        %568 = vdwg.mxu0
        %v569 = vld [vmem:[%s442] sm:$0xff]
        %v570 = vld [vmem:[#allocation11] sm:$0xff]
        %v571 = vld [vmem:[#allocation11 + $0x8] sm:$0xff]
        %v572 = vld [vmem:[#allocation11 + $0x10] sm:$0xff]
        %v573 = vld [vmem:[#allocation11 + $0x18] sm:$0xff]
        %v575 = vsel %vm517, %v569, 0
        %577 = vmatpush.msra.mxu0 0.0
        %578 = vmatpush.msra.mxu0 0.0
        %579 = vmatpush.msra.mxu0 0.0
        %580 = vmatpush.msra.mxu0 0.0
        %581 = vmatpush.msra.mxu0 0.0
        %582 = vmatpush.msra.mxu0 0.0
        %583 = vmatpush.msra.mxu0 0.0
        %584 = vmatpush.msra.mxu0 0.0
        %585 = vmatpush.msra.mxu0 0.0
        %586 = vmatpush.msra.mxu0 0.0
        %587 = vmatpush.msra.mxu0 0.0
        %588 = vmatpush.msra.mxu0 0.0
        %589 = vmatpush.msra.mxu0 %v573
        %590 = vmatpush.msra.mxu0 %v572
        %591 = vmatpush.msra.mxu0 %v571
        %592 = vmatpush.msra.mxu0 %v570
        %593 = vmatmul.f32.gmra.mxu0 %v575
        %v594 = vpop.f32.mrf.mxu0
        %v595 = vadd.f32 0.0, %v594
        %596 = vdwg.mxu0
        %598 = vrot.lane.b32.xlu0 %v539, 120
        %v599 = vpop.permute.xlu0 %598
        %600 = vrot.lane.b32.xlu0 %v539, 112
        %v601 = vpop.permute.xlu0 %600
        %602 = vrot.lane.b32.xlu0 %v539, 104
        %v603 = vpop.permute.xlu0 %602
        %605 = vrot.lane.b32.xlu0 %v567, 120
        %v606 = vpop.permute.xlu0 %605
        %608 = vrot.lane.b32.xlu0 %v567, 112
        %v609 = vpop.permute.xlu0 %608
        %611 = vrot.lane.b32.xlu0 %v567, 104
        %v612 = vpop.permute.xlu0 %611
        %615 = vrot.lane.b32.xlu0 %v595, 120
        %v616 = vpop.permute.xlu0 %615
        %618 = vrot.lane.b32.xlu0 %v595, 112
        %v619 = vpop.permute.xlu0 %618
        %621 = vrot.lane.b32.xlu0 %v595, 104
        %v622 = vpop.permute.xlu0 %621
        %624 = vxpose.xlu0.b32.start [1/16] %v567, 128
        %625 = vxpose.xlu0.b32.cont [2/16] 0.0, 128
        %626 = vxpose.xlu0.b32.cont [3/16] 0.0, 128
        %627 = vxpose.xlu0.b32.cont [4/16] 0.0, 128
        %628 = vxpose.xlu0.b32.cont [5/16] 0.0, 128
        %629 = vxpose.xlu0.b32.cont [6/16] 0.0, 128
        %630 = vxpose.xlu0.b32.cont [7/16] 0.0, 128
        %631 = vxpose.xlu0.b32.cont [8/16] 0.0, 128
        %632 = vxpose.xlu0.b32.cont [9/16] 0.0, 128
        %633 = vxpose.xlu0.b32.cont [10/16] 0.0, 128
        %634 = vxpose.xlu0.b32.cont [11/16] 0.0, 128
        %635 = vxpose.xlu0.b32.cont [12/16] 0.0, 128
        %636 = vxpose.xlu0.b32.cont [13/16] 0.0, 128
        %637 = vxpose.xlu0.b32.cont [14/16] 0.0, 128
        %638 = vxpose.xlu0.b32.cont [15/16] 0.0, 128
        %639 = vxpose.xlu0.b32.end [16/16] 0.0, 128
        %v640 = vpop.trf.xlu0
        %v641 = vpop.trf.xlu0
        %v642 = vpop.trf.xlu0
        %v643 = vpop.trf.xlu0
        %v644 = vpop.trf.xlu0
        %v645 = vpop.trf.xlu0
        %v646 = vpop.trf.xlu0
        %v647 = vpop.trf.xlu0
        %v648 = vpop.trf.xlu0
        %v649 = vpop.trf.xlu0
        %v650 = vpop.trf.xlu0
        %v651 = vpop.trf.xlu0
        %v652 = vpop.trf.xlu0
        %v653 = vpop.trf.xlu0
        %v654 = vpop.trf.xlu0
        %v655 = vpop.trf.xlu0
        %656 = vxpose.xlu0.b32.start [1/16] %v606, 128
        %657 = vxpose.xlu0.b32.cont [2/16] 0.0, 128
        %658 = vxpose.xlu0.b32.cont [3/16] 0.0, 128
        %659 = vxpose.xlu0.b32.cont [4/16] 0.0, 128
        %660 = vxpose.xlu0.b32.cont [5/16] 0.0, 128
        %661 = vxpose.xlu0.b32.cont [6/16] 0.0, 128
        %662 = vxpose.xlu0.b32.cont [7/16] 0.0, 128
        %663 = vxpose.xlu0.b32.cont [8/16] 0.0, 128
        %664 = vxpose.xlu0.b32.cont [9/16] 0.0, 128
        %665 = vxpose.xlu0.b32.cont [10/16] 0.0, 128
        %666 = vxpose.xlu0.b32.cont [11/16] 0.0, 128
        %667 = vxpose.xlu0.b32.cont [12/16] 0.0, 128
        %668 = vxpose.xlu0.b32.cont [13/16] 0.0, 128
        %669 = vxpose.xlu0.b32.cont [14/16] 0.0, 128
        %670 = vxpose.xlu0.b32.cont [15/16] 0.0, 128
        %671 = vxpose.xlu0.b32.end [16/16] 0.0, 128
        %v672 = vpop.trf.xlu0
        %v673 = vpop.trf.xlu0
        %v674 = vpop.trf.xlu0
        %v675 = vpop.trf.xlu0
        %v676 = vpop.trf.xlu0
        %v677 = vpop.trf.xlu0
        %v678 = vpop.trf.xlu0
        %v679 = vpop.trf.xlu0
        %v680 = vpop.trf.xlu0
        %v681 = vpop.trf.xlu0
        %v682 = vpop.trf.xlu0
        %v683 = vpop.trf.xlu0
        %v684 = vpop.trf.xlu0
        %v685 = vpop.trf.xlu0
        %v686 = vpop.trf.xlu0
        %v687 = vpop.trf.xlu0
        %688 = vxpose.xlu0.b32.start [1/16] %v609, 128
        %689 = vxpose.xlu0.b32.cont [2/16] 0.0, 128
        %690 = vxpose.xlu0.b32.cont [3/16] 0.0, 128
        %691 = vxpose.xlu0.b32.cont [4/16] 0.0, 128
        %692 = vxpose.xlu0.b32.cont [5/16] 0.0, 128
        %693 = vxpose.xlu0.b32.cont [6/16] 0.0, 128
        %694 = vxpose.xlu0.b32.cont [7/16] 0.0, 128
        %695 = vxpose.xlu0.b32.cont [8/16] 0.0, 128
        %696 = vxpose.xlu0.b32.cont [9/16] 0.0, 128
        %697 = vxpose.xlu0.b32.cont [10/16] 0.0, 128
        %698 = vxpose.xlu0.b32.cont [11/16] 0.0, 128
        %699 = vxpose.xlu0.b32.cont [12/16] 0.0, 128
        %700 = vxpose.xlu0.b32.cont [13/16] 0.0, 128
        %701 = vxpose.xlu0.b32.cont [14/16] 0.0, 128
        %702 = vxpose.xlu0.b32.cont [15/16] 0.0, 128
        %703 = vxpose.xlu0.b32.end [16/16] 0.0, 128
        %v704 = vpop.trf.xlu0
        %v705 = vpop.trf.xlu0
        %v706 = vpop.trf.xlu0
        %v707 = vpop.trf.xlu0
        %v708 = vpop.trf.xlu0
        %v709 = vpop.trf.xlu0
        %v710 = vpop.trf.xlu0
        %v711 = vpop.trf.xlu0
        %v712 = vpop.trf.xlu0
        %v713 = vpop.trf.xlu0
        %v714 = vpop.trf.xlu0
        %v715 = vpop.trf.xlu0
        %v716 = vpop.trf.xlu0
        %v717 = vpop.trf.xlu0
        %v718 = vpop.trf.xlu0
        %v719 = vpop.trf.xlu0
        %720 = vxpose.xlu0.b32.start [1/16] %v612, 128
        %721 = vxpose.xlu0.b32.cont [2/16] 0.0, 128
        %722 = vxpose.xlu0.b32.cont [3/16] 0.0, 128
        %723 = vxpose.xlu0.b32.cont [4/16] 0.0, 128
        %724 = vxpose.xlu0.b32.cont [5/16] 0.0, 128
        %725 = vxpose.xlu0.b32.cont [6/16] 0.0, 128
        %726 = vxpose.xlu0.b32.cont [7/16] 0.0, 128
        %727 = vxpose.xlu0.b32.cont [8/16] 0.0, 128
        %728 = vxpose.xlu0.b32.cont [9/16] 0.0, 128
        %729 = vxpose.xlu0.b32.cont [10/16] 0.0, 128
        %730 = vxpose.xlu0.b32.cont [11/16] 0.0, 128
        %731 = vxpose.xlu0.b32.cont [12/16] 0.0, 128
        %732 = vxpose.xlu0.b32.cont [13/16] 0.0, 128
        %733 = vxpose.xlu0.b32.cont [14/16] 0.0, 128
        %734 = vxpose.xlu0.b32.cont [15/16] 0.0, 128
        %735 = vxpose.xlu0.b32.end [16/16] 0.0, 128
        %v736 = vpop.trf.xlu0
        %v737 = vpop.trf.xlu0
        %v738 = vpop.trf.xlu0
        %v739 = vpop.trf.xlu0
        %v740 = vpop.trf.xlu0
        %v741 = vpop.trf.xlu0
        %v742 = vpop.trf.xlu0
        %v743 = vpop.trf.xlu0
        %v744 = vpop.trf.xlu0
        %v745 = vpop.trf.xlu0
        %v746 = vpop.trf.xlu0
        %v747 = vpop.trf.xlu0
        %v748 = vpop.trf.xlu0
        %v749 = vpop.trf.xlu0
        %v750 = vpop.trf.xlu0
        %v751 = vpop.trf.xlu0
        %vm752 = vcmask 64512
        %v753 = vsel %vm752, %v539, 0
        %755 = vmatpush.msra.mxu0 0.0
        %756 = vmatpush.msra.mxu0 0.0
        %757 = vmatpush.msra.mxu0 0.0
        %758 = vmatpush.msra.mxu0 0.0
        %759 = vmatpush.msra.mxu0 0.0
        %760 = vmatpush.msra.mxu0 0.0
        %761 = vmatpush.msra.mxu0 0.0
        %762 = vmatpush.msra.mxu0 0.0
        %763 = vmatpush.msra.mxu0 0.0
        %764 = vmatpush.msra.mxu0 0.0
        %765 = vmatpush.msra.mxu0 0.0
        %766 = vmatpush.msra.mxu0 0.0
        %767 = vmatpush.msra.mxu0 0.0
        %768 = vmatpush.msra.mxu0 0.0
        %769 = vmatpush.msra.mxu0 0.0
        %770 = vmatpush.msra.mxu0 %v640
        %771 = vmatmul.f32.gmra.mxu0 %v753
        %v772 = vpop.f32.mrf.mxu0
        %v773 = vadd.f32 0.0, %v772
        %774 = vdwg.mxu0
        %v775 = vsel %vm752, %v599, 0
        %777 = vmatpush.msra.mxu0 0.0
        %778 = vmatpush.msra.mxu0 0.0
        %779 = vmatpush.msra.mxu0 0.0
        %780 = vmatpush.msra.mxu0 0.0
        %781 = vmatpush.msra.mxu0 0.0
        %782 = vmatpush.msra.mxu0 0.0
        %783 = vmatpush.msra.mxu0 0.0
        %784 = vmatpush.msra.mxu0 0.0
        %785 = vmatpush.msra.mxu0 0.0
        %786 = vmatpush.msra.mxu0 0.0
        %787 = vmatpush.msra.mxu0 0.0
        %788 = vmatpush.msra.mxu0 0.0
        %789 = vmatpush.msra.mxu0 0.0
        %790 = vmatpush.msra.mxu0 0.0
        %791 = vmatpush.msra.mxu0 0.0
        %792 = vmatpush.msra.mxu0 %v672
        %793 = vmatmul.f32.gmra.mxu0 %v775
        %v794 = vpop.f32.mrf.mxu0
        %v795 = vadd.f32 0.0, %v794
        %796 = vdwg.mxu0
        %v797 = vsel %vm752, %v601, 0
        %799 = vmatpush.msra.mxu0 0.0
        %800 = vmatpush.msra.mxu0 0.0
        %801 = vmatpush.msra.mxu0 0.0
        %802 = vmatpush.msra.mxu0 0.0
        %803 = vmatpush.msra.mxu0 0.0
        %804 = vmatpush.msra.mxu0 0.0
        %805 = vmatpush.msra.mxu0 0.0
        %806 = vmatpush.msra.mxu0 0.0
        %807 = vmatpush.msra.mxu0 0.0
        %808 = vmatpush.msra.mxu0 0.0
        %809 = vmatpush.msra.mxu0 0.0
        %810 = vmatpush.msra.mxu0 0.0
        %811 = vmatpush.msra.mxu0 0.0
        %812 = vmatpush.msra.mxu0 0.0
        %813 = vmatpush.msra.mxu0 0.0
        %814 = vmatpush.msra.mxu0 %v704
        %815 = vmatmul.f32.gmra.mxu0 %v797
        %v816 = vpop.f32.mrf.mxu0
        %v817 = vadd.f32 0.0, %v816
        %818 = vdwg.mxu0
        %v819 = vsel %vm752, %v603, 0
        %821 = vmatpush.msra.mxu0 0.0
        %822 = vmatpush.msra.mxu0 0.0
        %823 = vmatpush.msra.mxu0 0.0
        %824 = vmatpush.msra.mxu0 0.0
        %825 = vmatpush.msra.mxu0 0.0
        %826 = vmatpush.msra.mxu0 0.0
        %827 = vmatpush.msra.mxu0 0.0
        %828 = vmatpush.msra.mxu0 0.0
        %829 = vmatpush.msra.mxu0 0.0
        %830 = vmatpush.msra.mxu0 0.0
        %831 = vmatpush.msra.mxu0 0.0
        %832 = vmatpush.msra.mxu0 0.0
        %833 = vmatpush.msra.mxu0 0.0
        %834 = vmatpush.msra.mxu0 0.0
        %835 = vmatpush.msra.mxu0 0.0
        %836 = vmatpush.msra.mxu0 %v736
        %837 = vmatmul.f32.gmra.mxu0 %v819
        %v838 = vpop.f32.mrf.mxu0
        %v839 = vadd.f32 0.0, %v838
        %840 = vdwg.mxu0
        %v841 = vsel %vm752, %v773, -inf
        %842 = vmax.xlane.f32.xlu0 %v841
        %v843 = vpop.xlane.xlu0 %842
        %v844 = vsel %vm752, %v795, -inf
        %845 = vmax.xlane.f32.xlu0 %v844
        %v846 = vpop.xlane.xlu0 %845
        %v847 = vsel %vm752, %v817, -inf
        %848 = vmax.xlane.f32.xlu0 %v847
        %v849 = vpop.xlane.xlu0 %848
        %v850 = vsel %vm752, %v839, -inf
        %851 = vmax.xlane.f32.xlu0 %v850
        %v852 = vpop.xlane.xlu0 %851
        %v853 = vsub.f32 %v773, %v843
        %v854 = vsub.f32 %v795, %v846
        %v855 = vsub.f32 %v817, %v849
        %v856 = vsub.f32 %v839, %v852
        %v857 = vmul.f32 %v853, 1.442695
        %v858 = vpow.pop %v857
        %v859 = vmul.f32 %v854, 1.442695
        %v860 = vpow.pop %v859
        %v861 = vmul.f32 %v855, 1.442695
        %v862 = vpow.pop %v861
        %v863 = vmul.f32 %v856, 1.442695
        %v864 = vpow.pop %v863
        %v865 = vsel %vm752, %v858, 0.0
        %866 = vadd.xlane.f32.xlu0 %v865
        %v867 = vpop.xlane.xlu0 %866
        %v868 = vsel %vm752, %v860, 0.0
        %869 = vadd.xlane.f32.xlu0 %v868
        %v870 = vpop.xlane.xlu0 %869
        %v871 = vsel %vm752, %v862, 0.0
        %872 = vadd.xlane.f32.xlu0 %v871
        %v873 = vpop.xlane.xlu0 %872
        %v874 = vsel %vm752, %v864, 0.0
        %875 = vadd.xlane.f32.xlu0 %v874
        %v876 = vpop.xlane.xlu0 %875
        %877 = vxpose.xlu0.b32.start [1/16] %v595, 128
        %878 = vxpose.xlu0.b32.cont [2/16] 0.0, 128
        %879 = vxpose.xlu0.b32.cont [3/16] 0.0, 128
        %880 = vxpose.xlu0.b32.cont [4/16] 0.0, 128
        %881 = vxpose.xlu0.b32.cont [5/16] 0.0, 128
        %882 = vxpose.xlu0.b32.cont [6/16] 0.0, 128
        %883 = vxpose.xlu0.b32.cont [7/16] 0.0, 128
        %884 = vxpose.xlu0.b32.cont [8/16] 0.0, 128
        %885 = vxpose.xlu0.b32.cont [9/16] 0.0, 128
        %886 = vxpose.xlu0.b32.cont [10/16] 0.0, 128
        %887 = vxpose.xlu0.b32.cont [11/16] 0.0, 128
        %888 = vxpose.xlu0.b32.cont [12/16] 0.0, 128
        %889 = vxpose.xlu0.b32.cont [13/16] 0.0, 128
        %890 = vxpose.xlu0.b32.cont [14/16] 0.0, 128
        %891 = vxpose.xlu0.b32.cont [15/16] 0.0, 128
        %892 = vxpose.xlu0.b32.end [16/16] 0.0, 128
        %v893 = vpop.trf.xlu0
        %v894 = vpop.trf.xlu0
        %v895 = vpop.trf.xlu0
        %v896 = vpop.trf.xlu0
        %v897 = vpop.trf.xlu0
        %v898 = vpop.trf.xlu0
        %v899 = vpop.trf.xlu0
        %v900 = vpop.trf.xlu0
        %v901 = vpop.trf.xlu0
        %v902 = vpop.trf.xlu0
        %v903 = vpop.trf.xlu0
        %v904 = vpop.trf.xlu0
        %v905 = vpop.trf.xlu0
        %v906 = vpop.trf.xlu0
        %v907 = vpop.trf.xlu0
        %v908 = vpop.trf.xlu0
        %909 = vxpose.xlu0.b32.start [1/16] %v616, 128
        %910 = vxpose.xlu0.b32.cont [2/16] 0.0, 128
        %911 = vxpose.xlu0.b32.cont [3/16] 0.0, 128
        %912 = vxpose.xlu0.b32.cont [4/16] 0.0, 128
        %913 = vxpose.xlu0.b32.cont [5/16] 0.0, 128
        %914 = vxpose.xlu0.b32.cont [6/16] 0.0, 128
        %915 = vxpose.xlu0.b32.cont [7/16] 0.0, 128
        %916 = vxpose.xlu0.b32.cont [8/16] 0.0, 128
        %917 = vxpose.xlu0.b32.cont [9/16] 0.0, 128
        %918 = vxpose.xlu0.b32.cont [10/16] 0.0, 128
        %919 = vxpose.xlu0.b32.cont [11/16] 0.0, 128
        %920 = vxpose.xlu0.b32.cont [12/16] 0.0, 128
        %921 = vxpose.xlu0.b32.cont [13/16] 0.0, 128
        %922 = vxpose.xlu0.b32.cont [14/16] 0.0, 128
        %923 = vxpose.xlu0.b32.cont [15/16] 0.0, 128
        %924 = vxpose.xlu0.b32.end [16/16] 0.0, 128
        %v925 = vpop.trf.xlu0
        %v926 = vpop.trf.xlu0
        %v927 = vpop.trf.xlu0
        %v928 = vpop.trf.xlu0
        %v929 = vpop.trf.xlu0
        %v930 = vpop.trf.xlu0
        %v931 = vpop.trf.xlu0
        %v932 = vpop.trf.xlu0
        %v933 = vpop.trf.xlu0
        %v934 = vpop.trf.xlu0
        %v935 = vpop.trf.xlu0
        %v936 = vpop.trf.xlu0
        %v937 = vpop.trf.xlu0
        %v938 = vpop.trf.xlu0
        %v939 = vpop.trf.xlu0
        %v940 = vpop.trf.xlu0
        %941 = vxpose.xlu0.b32.start [1/16] %v619, 128
        %942 = vxpose.xlu0.b32.cont [2/16] 0.0, 128
        %943 = vxpose.xlu0.b32.cont [3/16] 0.0, 128
        %944 = vxpose.xlu0.b32.cont [4/16] 0.0, 128
        %945 = vxpose.xlu0.b32.cont [5/16] 0.0, 128
        %946 = vxpose.xlu0.b32.cont [6/16] 0.0, 128
        %947 = vxpose.xlu0.b32.cont [7/16] 0.0, 128
        %948 = vxpose.xlu0.b32.cont [8/16] 0.0, 128
        %949 = vxpose.xlu0.b32.cont [9/16] 0.0, 128
        %950 = vxpose.xlu0.b32.cont [10/16] 0.0, 128
        %951 = vxpose.xlu0.b32.cont [11/16] 0.0, 128
        %952 = vxpose.xlu0.b32.cont [12/16] 0.0, 128
        %953 = vxpose.xlu0.b32.cont [13/16] 0.0, 128
        %954 = vxpose.xlu0.b32.cont [14/16] 0.0, 128
        %955 = vxpose.xlu0.b32.cont [15/16] 0.0, 128
        %956 = vxpose.xlu0.b32.end [16/16] 0.0, 128
        %v957 = vpop.trf.xlu0
        %v958 = vpop.trf.xlu0
        %v959 = vpop.trf.xlu0
        %v960 = vpop.trf.xlu0
        %v961 = vpop.trf.xlu0
        %v962 = vpop.trf.xlu0
        %v963 = vpop.trf.xlu0
        %v964 = vpop.trf.xlu0
        %v965 = vpop.trf.xlu0
        %v966 = vpop.trf.xlu0
        %v967 = vpop.trf.xlu0
        %v968 = vpop.trf.xlu0
        %v969 = vpop.trf.xlu0
        %v970 = vpop.trf.xlu0
        %v971 = vpop.trf.xlu0
        %v972 = vpop.trf.xlu0
        %973 = vxpose.xlu0.b32.start [1/16] %v622, 128
        %974 = vxpose.xlu0.b32.cont [2/16] 0.0, 128
        %975 = vxpose.xlu0.b32.cont [3/16] 0.0, 128
        %976 = vxpose.xlu0.b32.cont [4/16] 0.0, 128
        %977 = vxpose.xlu0.b32.cont [5/16] 0.0, 128
        %978 = vxpose.xlu0.b32.cont [6/16] 0.0, 128
        %979 = vxpose.xlu0.b32.cont [7/16] 0.0, 128
        %980 = vxpose.xlu0.b32.cont [8/16] 0.0, 128
        %981 = vxpose.xlu0.b32.cont [9/16] 0.0, 128
        %982 = vxpose.xlu0.b32.cont [10/16] 0.0, 128
        %983 = vxpose.xlu0.b32.cont [11/16] 0.0, 128
        %984 = vxpose.xlu0.b32.cont [12/16] 0.0, 128
        %985 = vxpose.xlu0.b32.cont [13/16] 0.0, 128
        %986 = vxpose.xlu0.b32.cont [14/16] 0.0, 128
        %987 = vxpose.xlu0.b32.cont [15/16] 0.0, 128
        %988 = vxpose.xlu0.b32.end [16/16] 0.0, 128
        %v989 = vpop.trf.xlu0
        %v990 = vpop.trf.xlu0
        %v991 = vpop.trf.xlu0
        %v992 = vpop.trf.xlu0
        %v993 = vpop.trf.xlu0
        %v994 = vpop.trf.xlu0
        %v995 = vpop.trf.xlu0
        %v996 = vpop.trf.xlu0
        %v997 = vpop.trf.xlu0
        %v998 = vpop.trf.xlu0
        %v999 = vpop.trf.xlu0
        %v1000 = vpop.trf.xlu0
        %v1001 = vpop.trf.xlu0
        %v1002 = vpop.trf.xlu0
        %v1003 = vpop.trf.xlu0
        %v1004 = vpop.trf.xlu0
        %v1006 = vsel %vm752, %v893, 0
        %v1009 = vsel %vm752, %v858, 0
        %1011 = vmatpush.xpose.msra.mxu0 0.0
        %1012 = vmatpush.xpose.msra.mxu0 0.0
        %1013 = vmatpush.xpose.msra.mxu0 0.0
        %1014 = vmatpush.xpose.msra.mxu0 0.0
        %1015 = vmatpush.xpose.msra.mxu0 0.0
        %1016 = vmatpush.xpose.msra.mxu0 0.0
        %1017 = vmatpush.xpose.msra.mxu0 0.0
        %1018 = vmatpush.xpose.msra.mxu0 0.0
        %1019 = vmatpush.xpose.msra.mxu0 0.0
        %1020 = vmatpush.xpose.msra.mxu0 0.0
        %1021 = vmatpush.xpose.msra.mxu0 0.0
        %1022 = vmatpush.xpose.msra.mxu0 0.0
        %1023 = vmatpush.xpose.msra.mxu0 0.0
        %1024 = vmatpush.xpose.msra.mxu0 0.0
        %1025 = vmatpush.xpose.msra.mxu0 0.0
        %1026 = vmatpush.xpose.msra.mxu0 %v1009
        %1027 = vmatmul.f32.gmra.mxu0 %v1006
        %v1028 = vpop.f32.mrf.mxu0
        %v1029 = vadd.f32 0.0, %v1028
        %1030 = vdwg.mxu0
        %v1032 = vsel %vm752, %v925, 0
        %v1035 = vsel %vm752, %v860, 0
        %1037 = vmatpush.xpose.msra.mxu0 0.0
        %1038 = vmatpush.xpose.msra.mxu0 0.0
        %1039 = vmatpush.xpose.msra.mxu0 0.0
        %1040 = vmatpush.xpose.msra.mxu0 0.0
        %1041 = vmatpush.xpose.msra.mxu0 0.0
        %1042 = vmatpush.xpose.msra.mxu0 0.0
        %1043 = vmatpush.xpose.msra.mxu0 0.0
        %1044 = vmatpush.xpose.msra.mxu0 0.0
        %1045 = vmatpush.xpose.msra.mxu0 0.0
        %1046 = vmatpush.xpose.msra.mxu0 0.0
        %1047 = vmatpush.xpose.msra.mxu0 0.0
        %1048 = vmatpush.xpose.msra.mxu0 0.0
        %1049 = vmatpush.xpose.msra.mxu0 0.0
        %1050 = vmatpush.xpose.msra.mxu0 0.0
        %1051 = vmatpush.xpose.msra.mxu0 0.0
        %1052 = vmatpush.xpose.msra.mxu0 %v1035
        %1053 = vmatmul.f32.gmra.mxu0 %v1032
        %v1054 = vpop.f32.mrf.mxu0
        %v1055 = vadd.f32 0.0, %v1054
        %1056 = vdwg.mxu0
        %v1058 = vsel %vm752, %v957, 0
        %v1061 = vsel %vm752, %v862, 0
        %1063 = vmatpush.xpose.msra.mxu0 0.0
        %1064 = vmatpush.xpose.msra.mxu0 0.0
        %1065 = vmatpush.xpose.msra.mxu0 0.0
        %1066 = vmatpush.xpose.msra.mxu0 0.0
        %1067 = vmatpush.xpose.msra.mxu0 0.0
        %1068 = vmatpush.xpose.msra.mxu0 0.0
        %1069 = vmatpush.xpose.msra.mxu0 0.0
        %1070 = vmatpush.xpose.msra.mxu0 0.0
        %1071 = vmatpush.xpose.msra.mxu0 0.0
        %1072 = vmatpush.xpose.msra.mxu0 0.0
        %1073 = vmatpush.xpose.msra.mxu0 0.0
        %1074 = vmatpush.xpose.msra.mxu0 0.0
        %1075 = vmatpush.xpose.msra.mxu0 0.0
        %1076 = vmatpush.xpose.msra.mxu0 0.0
        %1077 = vmatpush.xpose.msra.mxu0 0.0
        %1078 = vmatpush.xpose.msra.mxu0 %v1061
        %1079 = vmatmul.f32.gmra.mxu0 %v1058
        %v1080 = vpop.f32.mrf.mxu0
        %v1081 = vadd.f32 0.0, %v1080
        %1082 = vdwg.mxu0
        %v1084 = vsel %vm752, %v989, 0
        %v1087 = vsel %vm752, %v864, 0
        %1089 = vmatpush.xpose.msra.mxu0 0.0
        %1090 = vmatpush.xpose.msra.mxu0 0.0
        %1091 = vmatpush.xpose.msra.mxu0 0.0
        %1092 = vmatpush.xpose.msra.mxu0 0.0
        %1093 = vmatpush.xpose.msra.mxu0 0.0
        %1094 = vmatpush.xpose.msra.mxu0 0.0
        %1095 = vmatpush.xpose.msra.mxu0 0.0
        %1096 = vmatpush.xpose.msra.mxu0 0.0
        %1097 = vmatpush.xpose.msra.mxu0 0.0
        %1098 = vmatpush.xpose.msra.mxu0 0.0
        %1099 = vmatpush.xpose.msra.mxu0 0.0
        %1100 = vmatpush.xpose.msra.mxu0 0.0
        %1101 = vmatpush.xpose.msra.mxu0 0.0
        %1102 = vmatpush.xpose.msra.mxu0 0.0
        %1103 = vmatpush.xpose.msra.mxu0 0.0
        %1104 = vmatpush.xpose.msra.mxu0 %v1087
        %1105 = vmatmul.f32.gmra.mxu0 %v1084
        %v1106 = vpop.f32.mrf.mxu0
        %v1107 = vadd.f32 0.0, %v1106
        %1108 = vdwg.mxu0
        %1109 = vxpose.xlu0.b32.start [1/16] %v1029, 128
        %1110 = vxpose.xlu0.b32.cont [2/16] 0.0, 128
        %1111 = vxpose.xlu0.b32.cont [3/16] 0.0, 128
        %1112 = vxpose.xlu0.b32.cont [4/16] 0.0, 128
        %1113 = vxpose.xlu0.b32.cont [5/16] 0.0, 128
        %1114 = vxpose.xlu0.b32.cont [6/16] 0.0, 128
        %1115 = vxpose.xlu0.b32.cont [7/16] 0.0, 128
        %1116 = vxpose.xlu0.b32.cont [8/16] 0.0, 128
        %1117 = vxpose.xlu0.b32.cont [9/16] 0.0, 128
        %1118 = vxpose.xlu0.b32.cont [10/16] 0.0, 128
        %1119 = vxpose.xlu0.b32.cont [11/16] 0.0, 128
        %1120 = vxpose.xlu0.b32.cont [12/16] 0.0, 128
        %1121 = vxpose.xlu0.b32.cont [13/16] 0.0, 128
        %1122 = vxpose.xlu0.b32.cont [14/16] 0.0, 128
        %1123 = vxpose.xlu0.b32.cont [15/16] 0.0, 128
        %1124 = vxpose.xlu0.b32.end [16/16] 0.0, 128
        %v1125 = vpop.trf.xlu0
        %v1126 = vpop.trf.xlu0
        %v1127 = vpop.trf.xlu0
        %v1128 = vpop.trf.xlu0
        %v1129 = vpop.trf.xlu0
        %v1130 = vpop.trf.xlu0
        %v1131 = vpop.trf.xlu0
        %v1132 = vpop.trf.xlu0
        %v1133 = vpop.trf.xlu0
        %v1134 = vpop.trf.xlu0
        %v1135 = vpop.trf.xlu0
        %v1136 = vpop.trf.xlu0
        %v1137 = vpop.trf.xlu0
        %v1138 = vpop.trf.xlu0
        %v1139 = vpop.trf.xlu0
        %v1140 = vpop.trf.xlu0
        %1141 = vxpose.xlu0.b32.start [1/16] %v1055, 128
        %1142 = vxpose.xlu0.b32.cont [2/16] 0.0, 128
        %1143 = vxpose.xlu0.b32.cont [3/16] 0.0, 128
        %1144 = vxpose.xlu0.b32.cont [4/16] 0.0, 128
        %1145 = vxpose.xlu0.b32.cont [5/16] 0.0, 128
        %1146 = vxpose.xlu0.b32.cont [6/16] 0.0, 128
        %1147 = vxpose.xlu0.b32.cont [7/16] 0.0, 128
        %1148 = vxpose.xlu0.b32.cont [8/16] 0.0, 128
        %1149 = vxpose.xlu0.b32.cont [9/16] 0.0, 128
        %1150 = vxpose.xlu0.b32.cont [10/16] 0.0, 128
        %1151 = vxpose.xlu0.b32.cont [11/16] 0.0, 128
        %1152 = vxpose.xlu0.b32.cont [12/16] 0.0, 128
        %1153 = vxpose.xlu0.b32.cont [13/16] 0.0, 128
        %1154 = vxpose.xlu0.b32.cont [14/16] 0.0, 128
        %1155 = vxpose.xlu0.b32.cont [15/16] 0.0, 128
        %1156 = vxpose.xlu0.b32.end [16/16] 0.0, 128
        %v1157 = vpop.trf.xlu0
        %v1158 = vpop.trf.xlu0
        %v1159 = vpop.trf.xlu0
        %v1160 = vpop.trf.xlu0
        %v1161 = vpop.trf.xlu0
        %v1162 = vpop.trf.xlu0
        %v1163 = vpop.trf.xlu0
        %v1164 = vpop.trf.xlu0
        %v1165 = vpop.trf.xlu0
        %v1166 = vpop.trf.xlu0
        %v1167 = vpop.trf.xlu0
        %v1168 = vpop.trf.xlu0
        %v1169 = vpop.trf.xlu0
        %v1170 = vpop.trf.xlu0
        %v1171 = vpop.trf.xlu0
        %v1172 = vpop.trf.xlu0
        %1173 = vxpose.xlu0.b32.start [1/16] %v1081, 128
        %1174 = vxpose.xlu0.b32.cont [2/16] 0.0, 128
        %1175 = vxpose.xlu0.b32.cont [3/16] 0.0, 128
        %1176 = vxpose.xlu0.b32.cont [4/16] 0.0, 128
        %1177 = vxpose.xlu0.b32.cont [5/16] 0.0, 128
        %1178 = vxpose.xlu0.b32.cont [6/16] 0.0, 128
        %1179 = vxpose.xlu0.b32.cont [7/16] 0.0, 128
        %1180 = vxpose.xlu0.b32.cont [8/16] 0.0, 128
        %1181 = vxpose.xlu0.b32.cont [9/16] 0.0, 128
        %1182 = vxpose.xlu0.b32.cont [10/16] 0.0, 128
        %1183 = vxpose.xlu0.b32.cont [11/16] 0.0, 128
        %1184 = vxpose.xlu0.b32.cont [12/16] 0.0, 128
        %1185 = vxpose.xlu0.b32.cont [13/16] 0.0, 128
        %1186 = vxpose.xlu0.b32.cont [14/16] 0.0, 128
        %1187 = vxpose.xlu0.b32.cont [15/16] 0.0, 128
        %1188 = vxpose.xlu0.b32.end [16/16] 0.0, 128
        %v1189 = vpop.trf.xlu0
        %v1190 = vpop.trf.xlu0
        %v1191 = vpop.trf.xlu0
        %v1192 = vpop.trf.xlu0
        %v1193 = vpop.trf.xlu0
        %v1194 = vpop.trf.xlu0
        %v1195 = vpop.trf.xlu0
        %v1196 = vpop.trf.xlu0
        %v1197 = vpop.trf.xlu0
        %v1198 = vpop.trf.xlu0
        %v1199 = vpop.trf.xlu0
        %v1200 = vpop.trf.xlu0
        %v1201 = vpop.trf.xlu0
        %v1202 = vpop.trf.xlu0
        %v1203 = vpop.trf.xlu0
        %v1204 = vpop.trf.xlu0
        %1205 = vxpose.xlu0.b32.start [1/16] %v1107, 128
        %1206 = vxpose.xlu0.b32.cont [2/16] 0.0, 128
        %1207 = vxpose.xlu0.b32.cont [3/16] 0.0, 128
        %1208 = vxpose.xlu0.b32.cont [4/16] 0.0, 128
        %1209 = vxpose.xlu0.b32.cont [5/16] 0.0, 128
        %1210 = vxpose.xlu0.b32.cont [6/16] 0.0, 128
        %1211 = vxpose.xlu0.b32.cont [7/16] 0.0, 128
        %1212 = vxpose.xlu0.b32.cont [8/16] 0.0, 128
        %1213 = vxpose.xlu0.b32.cont [9/16] 0.0, 128
        %1214 = vxpose.xlu0.b32.cont [10/16] 0.0, 128
        %1215 = vxpose.xlu0.b32.cont [11/16] 0.0, 128
        %1216 = vxpose.xlu0.b32.cont [12/16] 0.0, 128
        %1217 = vxpose.xlu0.b32.cont [13/16] 0.0, 128
        %1218 = vxpose.xlu0.b32.cont [14/16] 0.0, 128
        %1219 = vxpose.xlu0.b32.cont [15/16] 0.0, 128
        %1220 = vxpose.xlu0.b32.end [16/16] 0.0, 128
        %v1221 = vpop.trf.xlu0
        %v1222 = vpop.trf.xlu0
        %v1223 = vpop.trf.xlu0
        %v1224 = vpop.trf.xlu0
        %v1225 = vpop.trf.xlu0
        %v1226 = vpop.trf.xlu0
        %v1227 = vpop.trf.xlu0
        %v1228 = vpop.trf.xlu0
        %v1229 = vpop.trf.xlu0
        %v1230 = vpop.trf.xlu0
        %v1231 = vpop.trf.xlu0
        %v1232 = vpop.trf.xlu0
        %v1233 = vpop.trf.xlu0
        %v1234 = vpop.trf.xlu0
        %v1235 = vpop.trf.xlu0
        %v1236 = vpop.trf.xlu0
        %v1237 = vrot.slane %v1189, 4
        %vm1238 = vcmask 1047556
        %v1239 = vsel %vm1238, %v1237, %v1125
        %v1240 = vrot.slane %v1125, 4
        %v1241 = vsel %vm1238, %v1189, %v1240
        %v1243 = vunpack.c.l.s4 1983009808
        %v1244 = vunpack.c.0.s8 %v1243
        %v1245 = vperm.slane %v1239, %v1244
        %v1247 = vunpack.c.l.s4 1983009808
        %v1248 = vunpack.c.0.s8 %v1247
        %v1249 = vperm.slane %v1241, %v1248
        %v1250 = vrot.slane %v1221, 4
        %v1251 = vsel %vm1238, %v1250, %v1157
        %v1252 = vrot.slane %v1157, 4
        %v1253 = vsel %vm1238, %v1221, %v1252
        %v1255 = vunpack.c.l.s4 1983009808
        %v1256 = vunpack.c.0.s8 %v1255
        %v1257 = vperm.slane %v1251, %v1256
        %v1259 = vunpack.c.l.s4 1983009808
        %v1260 = vunpack.c.0.s8 %v1259
        %v1261 = vperm.slane %v1253, %v1260
        %v1262 = vrot.slane %v1257, 4
        %v1263 = vsel %vm1238, %v1262, %v1245
        %v1264 = vrot.slane %v1245, 4
        %v1265 = vsel %vm1238, %v1257, %v1264
        %v1267 = vunpack.c.l.s4 1934713408
        %v1268 = vunpack.c.0.s8 %v1267
        %v1269 = vperm.slane %v1263, %v1268
        %v1271 = vunpack.c.l.s4 1934713408
        %v1272 = vunpack.c.0.s8 %v1271
        %v1273 = vperm.slane %v1265, %v1272
        %v1274 = vrot.slane %v1261, 4
        %v1275 = vsel %vm1238, %v1274, %v1249
        %v1276 = vrot.slane %v1249, 4
        %v1277 = vsel %vm1238, %v1261, %v1276
        %v1279 = vunpack.c.l.s4 1934713408
        %v1280 = vunpack.c.0.s8 %v1279
        %v1281 = vperm.slane %v1275, %v1280
        %v1283 = vunpack.c.l.s4 1934713408
        %v1284 = vunpack.c.0.s8 %v1283
        %v1285 = vperm.slane %v1277, %v1284
        %v1286 = vrot.slane %v1269, 4
        %v1287 = vsel %vm1238, 0.0, %v1286
        %v1288 = vrot.slane %v1273, 4
        %v1289 = vsel %vm1238, 0.0, %v1288
        %v1290 = vrot.slane %v1281, 4
        %v1291 = vsel %vm1238, 0.0, %v1290
        %v1292 = vrot.slane %v1285, 4
        %v1293 = vsel %vm1238, 0.0, %v1292
        %v1294 = vrcp.pop %v867
        %v1295 = vmul.f32 %v867, %v1294
        %v1296 = vsub.f32 1.0, %v1295
        %v1297 = vmul.f32 %v1294, %v1296
        %v1298 = vadd.f32 %v1294, %v1297
        %vm1299 = vweird.f32 %v867
        %vm1300 = vweird.f32 %v1294
        %vm1301 = vmor %vm1299, %vm1300
        %v1302 = vsel %vm1301, %v1294, %v1298
        %v1303 = vand.u32 2147483647, %v867
        %vm1304 = vcmp.eq.f32.partialorder %v1303, 8.507059e+37
        %v1305 = vand.u32 %v867, 2147483648
        %v1306 = vor.u32 1.1754944e-38, %v1305
        %v1307 = vsel %vm1304, %v1306, %v1302
        %v1308 = vrcp.pop %v870
        %v1309 = vmul.f32 %v870, %v1308
        %v1310 = vsub.f32 1.0, %v1309
        %v1311 = vmul.f32 %v1308, %v1310
        %v1312 = vadd.f32 %v1308, %v1311
        %vm1313 = vweird.f32 %v870
        %vm1314 = vweird.f32 %v1308
        %vm1315 = vmor %vm1313, %vm1314
        %v1316 = vsel %vm1315, %v1308, %v1312
        %v1317 = vand.u32 2147483647, %v870
        %vm1318 = vcmp.eq.f32.partialorder %v1317, 8.507059e+37
        %v1319 = vand.u32 %v870, 2147483648
        %v1320 = vor.u32 1.1754944e-38, %v1319
        %v1321 = vsel %vm1318, %v1320, %v1316
        %v1322 = vrcp.pop %v873
        %v1323 = vmul.f32 %v873, %v1322
        %v1324 = vsub.f32 1.0, %v1323
        %v1325 = vmul.f32 %v1322, %v1324
        %v1326 = vadd.f32 %v1322, %v1325
        %vm1327 = vweird.f32 %v873
        %vm1328 = vweird.f32 %v1322
        %vm1329 = vmor %vm1327, %vm1328
        %v1330 = vsel %vm1329, %v1322, %v1326
        %v1331 = vand.u32 2147483647, %v873
        %vm1332 = vcmp.eq.f32.partialorder %v1331, 8.507059e+37
        %v1333 = vand.u32 %v873, 2147483648
        %v1334 = vor.u32 1.1754944e-38, %v1333
        %v1335 = vsel %vm1332, %v1334, %v1330
        %v1336 = vrcp.pop %v876
        %v1337 = vmul.f32 %v876, %v1336
        %v1338 = vsub.f32 1.0, %v1337
        %v1339 = vmul.f32 %v1336, %v1338
        %v1340 = vadd.f32 %v1336, %v1339
        %vm1341 = vweird.f32 %v876
        %vm1342 = vweird.f32 %v1336
        %vm1343 = vmor %vm1341, %vm1342
        %v1344 = vsel %vm1343, %v1336, %v1340
        %v1345 = vand.u32 2147483647, %v876
        %vm1346 = vcmp.eq.f32.partialorder %v1345, 8.507059e+37
        %v1347 = vand.u32 %v876, 2147483648
        %v1348 = vor.u32 1.1754944e-38, %v1347
        %v1349 = vsel %vm1346, %v1348, %v1344
        %v1354 = vlaneseq
        %v1355 = vand.u32 %v1354, 127
        %v1356 = vperm.slane %v1307, %v1355
        %v1357 = vperm.slane %v1321, %v1355
        %v1358 = vperm.slane %v1335, %v1355
        %v1359 = vperm.slane %v1349, %v1355
        %vm1360 = vcmask 1041409
        %v1361 = vsel %vm1360, %v1357, %v1356
        %vm1362 = vcmask 1042434
        %v1363 = vsel %vm1362, %v1358, %v1361
        %vm1364 = vcmask 1043459
        %v1365 = vsel %vm1364, %v1359, %v1363
        %1367 = vxpose.xlu0.b32.start [1/16] %v1365, 128
        %1368 = vxpose.xlu0.b32.cont [2/16] 0.0, 128
        %1369 = vxpose.xlu0.b32.cont [3/16] 0.0, 128
        %1370 = vxpose.xlu0.b32.cont [4/16] 0.0, 128
        %1371 = vxpose.xlu0.b32.cont [5/16] 0.0, 128
        %1372 = vxpose.xlu0.b32.cont [6/16] 0.0, 128
        %1373 = vxpose.xlu0.b32.cont [7/16] 0.0, 128
        %1374 = vxpose.xlu0.b32.cont [8/16] 0.0, 128
        %1375 = vxpose.xlu0.b32.cont [9/16] 0.0, 128
        %1376 = vxpose.xlu0.b32.cont [10/16] 0.0, 128
        %1377 = vxpose.xlu0.b32.cont [11/16] 0.0, 128
        %1378 = vxpose.xlu0.b32.cont [12/16] 0.0, 128
        %1379 = vxpose.xlu0.b32.cont [13/16] 0.0, 128
        %1380 = vxpose.xlu0.b32.cont [14/16] 0.0, 128
        %1381 = vxpose.xlu0.b32.cont [15/16] 0.0, 128
        %1382 = vxpose.xlu0.b32.end [16/16] 0.0, 128
        %v1383 = vpop.trf.xlu0
        %v1384 = vpop.trf.xlu0
        %v1385 = vpop.trf.xlu0
        %v1386 = vpop.trf.xlu0
        %v1387 = vpop.trf.xlu0
        %v1388 = vpop.trf.xlu0
        %v1389 = vpop.trf.xlu0
        %v1390 = vpop.trf.xlu0
        %v1391 = vpop.trf.xlu0
        %v1392 = vpop.trf.xlu0
        %v1393 = vpop.trf.xlu0
        %v1394 = vpop.trf.xlu0
        %v1395 = vpop.trf.xlu0
        %v1396 = vpop.trf.xlu0
        %v1397 = vpop.trf.xlu0
        %v1398 = vpop.trf.xlu0
        %v1399 = vperm.slane %v1383, 0
        %v1400 = vlaneseq
        %v1401 = vshrl.u32 %v1400, 7
        %1403 = vset.pattern.permute.xlu0 %v1401
        %1404 = vperm.xlu0 %1403, %v1399
        %v1405 = vpop.permute.xlu0 %1404
        %v1406 = vperm.slane %v1383, 1
        %v1407 = vlaneseq
        %v1408 = vshrl.u32 %v1407, 7
        %1410 = vset.pattern.permute.xlu0 %v1408
        %1411 = vperm.xlu0 %1410, %v1406
        %v1412 = vpop.permute.xlu0 %1411
        %v1413 = vperm.slane %v1383, 2
        %v1414 = vlaneseq
        %v1415 = vshrl.u32 %v1414, 7
        %1417 = vset.pattern.permute.xlu0 %v1415
        %1418 = vperm.xlu0 %1417, %v1413
        %v1419 = vpop.permute.xlu0 %1418
        %v1420 = vperm.slane %v1383, 3
        %v1421 = vlaneseq
        %v1422 = vshrl.u32 %v1421, 7
        %1424 = vset.pattern.permute.xlu0 %v1422
        %1425 = vperm.xlu0 %1424, %v1420
        %v1426 = vpop.permute.xlu0 %1425
        %v1427 = vperm.slane %v1383, 4
        %v1428 = vlaneseq
        %v1429 = vshrl.u32 %v1428, 7
        %1431 = vset.pattern.permute.xlu0 %v1429
        %1432 = vperm.xlu0 %1431, %v1427
        %v1433 = vpop.permute.xlu0 %1432
        %v1434 = vperm.slane %v1383, 5
        %v1435 = vlaneseq
        %v1436 = vshrl.u32 %v1435, 7
        %1438 = vset.pattern.permute.xlu0 %v1436
        %1439 = vperm.xlu0 %1438, %v1434
        %v1440 = vpop.permute.xlu0 %1439
        %v1441 = vperm.slane %v1383, 6
        %v1442 = vlaneseq
        %v1443 = vshrl.u32 %v1442, 7
        %1445 = vset.pattern.permute.xlu0 %v1443
        %1446 = vperm.xlu0 %1445, %v1441
        %v1447 = vpop.permute.xlu0 %1446
        %v1448 = vperm.slane %v1383, 7
        %v1449 = vlaneseq
        %v1450 = vshrl.u32 %v1449, 7
        %1452 = vset.pattern.permute.xlu0 %v1450
        %1453 = vperm.xlu0 %1452, %v1448
        %v1454 = vpop.permute.xlu0 %1453
        %v1455 = vmul.f32 %v1269, %v1405
        %v1456 = vmul.f32 %v1287, %v1412
        %v1457 = vmul.f32 %v1273, %v1419
        %v1458 = vmul.f32 %v1289, %v1426
        %v1459 = vmul.f32 %v1281, %v1433
        %v1460 = vmul.f32 %v1291, %v1440
        %v1461 = vmul.f32 %v1285, %v1447
        %v1462 = vmul.f32 %v1293, %v1454
        %v1463 = vrot.slane %v1457, 4
        %v1464 = vsel %vm1238, %v1463, %v1455
        %v1466 = vunpack.c.l.s4 1983009808
        %v1467 = vunpack.c.0.s8 %v1466
        %v1468 = vperm.slane %v1464, %v1467
        %v1469 = vrot.slane %v1458, 4
        %v1470 = vsel %vm1238, %v1469, %v1456
        %v1472 = vunpack.c.l.s4 1983009808
        %v1473 = vunpack.c.0.s8 %v1472
        %v1474 = vperm.slane %v1470, %v1473
        %v1475 = vrot.slane %v1461, 4
        %v1476 = vsel %vm1238, %v1475, %v1459
        %v1478 = vunpack.c.l.s4 1983009808
        %v1479 = vunpack.c.0.s8 %v1478
        %v1480 = vperm.slane %v1476, %v1479
        %v1481 = vrot.slane %v1462, 4
        %v1482 = vsel %vm1238, %v1481, %v1460
        %v1484 = vunpack.c.l.s4 1983009808
        %v1485 = vunpack.c.0.s8 %v1484
        %v1486 = vperm.slane %v1482, %v1485
        %v1487 = vrot.slane %v1474, 4
        %v1488 = vsel %vm1238, %v1487, %v1468
        %v1489 = vrot.slane %v1468, 4
        %v1490 = vsel %vm1238, %v1474, %v1489
        %v1492 = vunpack.c.l.s4 1934713408
        %v1493 = vunpack.c.0.s8 %v1492
        %v1494 = vperm.slane %v1488, %v1493
        %v1496 = vunpack.c.l.s4 1934713408
        %v1497 = vunpack.c.0.s8 %v1496
        %v1498 = vperm.slane %v1490, %v1497
        %v1499 = vrot.slane %v1486, 4
        %v1500 = vsel %vm1238, %v1499, %v1480
        %v1501 = vrot.slane %v1480, 4
        %v1502 = vsel %vm1238, %v1486, %v1501
        %v1504 = vunpack.c.l.s4 1934713408
        %v1505 = vunpack.c.0.s8 %v1504
        %v1506 = vperm.slane %v1500, %v1505
        %v1508 = vunpack.c.l.s4 1934713408
        %v1509 = vunpack.c.0.s8 %v1508
        %v1510 = vperm.slane %v1502, %v1509
        %v1511 = vrot.slane %v1506, 4
        %v1512 = vsel %vm1238, %v1511, %v1494
        %v1513 = vrot.slane %v1494, 4
        %v1514 = vsel %vm1238, %v1506, %v1513
        %v1515 = vrot.slane %v1510, 4
        %v1516 = vsel %vm1238, %v1515, %v1498
        %v1517 = vrot.slane %v1498, 4
        %v1518 = vsel %vm1238, %v1510, %v1517
        %1520 = vrot.lane.b32.xlu0 %v1514, 8
        %v1521 = vpop.permute.xlu0 %1520
        %1524 = vrot.lane.b32.xlu0 %v1516, 16
        %v1525 = vpop.permute.xlu0 %1524
        %1528 = vrot.lane.b32.xlu0 %v1518, 24
        %v1529 = vpop.permute.xlu0 %1528
        %v1531 = vsel %vm752, %v1512, %v1521
        %vm1532 = vcmask 130048
        %v1533 = vsel %vm1532, %v1531, %v1525
        %vm1534 = vcmask 195584
        %v1535 = vsel %vm1534, %v1533, %v1529
        %v1536 = vld [vmem:[#allocation13] sm:$0xff]
        %v1537 = vld [vmem:[#allocation13 + $0x8] sm:$0xff]
        %v1538 = vld [vmem:[#allocation13 + $0x10] sm:$0xff]
        %v1539 = vld [vmem:[#allocation13 + $0x18] sm:$0xff]
        %v1540 = vld [vmem:[%s8] sm:$0x1]
        %v1542 = vperm.slane %v1540, 0
        %v1545 = vsel %vm517, %v1535, 0
        %1547 = vmatpush.msra.mxu0 0.0
        %1548 = vmatpush.msra.mxu0 0.0
        %1549 = vmatpush.msra.mxu0 0.0
        %1550 = vmatpush.msra.mxu0 0.0
        %1551 = vmatpush.msra.mxu0 0.0
        %1552 = vmatpush.msra.mxu0 0.0
        %1553 = vmatpush.msra.mxu0 0.0
        %1554 = vmatpush.msra.mxu0 0.0
        %1555 = vmatpush.msra.mxu0 0.0
        %1556 = vmatpush.msra.mxu0 0.0
        %1557 = vmatpush.msra.mxu0 0.0
        %1558 = vmatpush.msra.mxu0 0.0
        %1559 = vmatpush.msra.mxu0 %v1539
        %1560 = vmatpush.msra.mxu0 %v1538
        %1561 = vmatpush.msra.mxu0 %v1537
        %1562 = vmatpush.msra.mxu0 %v1536
        %1563 = vmatmul.f32.gmra.mxu0 %v1545
        %v1564 = vpop.f32.mrf.mxu0
        %v1565 = vadd.f32 %v1542, %v1564
        %1566 = vdwg.mxu0
        %1567 = vst.msk [vmem:[%s507] sm:$0xff] %vm517, %v1565
        %s1568 = sand.u32 %s259, 1
        %s1569 = scalar_lea.sflag [#allocation4], %s1568
        %s1570 = sand.u32 %s259, 1
        %s1571 = smul.addr %s1570, 8
        %s1572 = scalar_lea.vmem [#allocation14], %s1571
        // Predicated region
        $region85: #{tpu_custom_call.1} parent=55 // pred_check
          %p1573 = pneg %p269
        $region86: #{tpu_custom_call.1} parent=55 // pred_check_branch
          %1575 = sbr.rel (%p1573) target = $region88
        $region87: #{tpu_custom_call.1} parent=55 // pred_region
          %1577 = vsyncadd %s1569, 0
          %s1578 = sadd.s32 %s36, %s35
          %s1579 = smul.addr %s1578, 8
          %s1580 = scalar_lea.hbm %s9, %s1579
          %s1582 = sshll.u32 %s1572, 4
          %s1583 = int_to_ptr.vmem [resolvable:$true] %s1582
          %s1584 = sshll.u32 %s1580, 4
          %s1585 = int_to_ptr.hbm [resolvable:$true] %s1584
          %1587 = dma.vmem_to_hbm [thread:$0]  %s1583, 128, %s1585, %s1569
        $region88: #{tpu_custom_call.1} parent=55 // pred_fallthru
          _
      $region56: #{tpu_custom_call.1} parent=5 // pred_fallthru
        _
      %p1588 = scmp.le.s32.totalorder 2, %s26
      // Predicated region
      $region89: #{tpu_custom_call.1} parent=5 // pred_check
        %p1589 = pneg %p1588
      $region90: #{tpu_custom_call.1} parent=5 // pred_check_branch
        %1591 = sbr.rel (%p1589) target = $region92
      $region91: #{tpu_custom_call.1} parent=5 // pred_region
        %s1592 = ssub.s32 %s26, 2
        // Predicated region
        $region93: #{tpu_custom_call.1} parent=91 // pred_check
          %p1593 = pneg %p275
        $region94: #{tpu_custom_call.1} parent=91 // pred_check_branch
          %1595 = sbr.rel (%p1593) target = $region96
        $region95: #{tpu_custom_call.1} parent=91 // pred_region
          %s1596 = sand.u32 %s260, 1
          %s1597 = scalar_lea.sflag [#allocation4], %s1596
          %s1598 = sand.u32 %s260, 1
          %s1599 = smul.addr %s1598, 8
          %s1600 = scalar_lea.vmem [#allocation14], %s1599
          %1602 = dma.done %s1597, 128
        $region96: #{tpu_custom_call.1} parent=91 // pred_fallthru
          _
      $region92: #{tpu_custom_call.1} parent=5 // pred_fallthru
        _
    $region6: #{tpu_custom_call.1} parent=1 // loop_footer
      %s30 = sadd.s32 1, %s26
    $region7: #{tpu_custom_call.1} parent=1 // loop_footer_branch
      %25 = sbr.rel target = $region3
    $region8: #{tpu_custom_call.1} parent=1 // loop_exit
      _
    %1603 = vsyncpa [#allocation3], 1
    %s1604 = scalar_lea.sflag [#allocation3], 1
    %1605 = vsyncpa %s1604, 1
    %1606 = vsyncpa [#allocation6], 1
    %s1607 = scalar_lea.sflag [#allocation6], 1
    %1608 = vsyncpa %s1607, 1
    %1609 = vsyncpa [#allocation9], 1
    %1610 = vsyncpa [#allocation12], 1
    %1611 = vsyncpa [#allocation4], 1
    %s1612 = scalar_lea.sflag [#allocation4], 1
    %1613 = vsyncpa %s1612, 1

</llo_original>
